<compile_context>
chip_gen: v5e
topology: v5e:2x2
jax: 0.10.0
libtpu: 0.0.40
codegen_flags: <defaults>
</compile_context>

<pallas_src>
import functools

import jax
import jax.numpy as jnp
from jax import lax
from jax.experimental import pallas as pl
from jax.experimental.pallas import tpu as pltpu

EPS = 1e-5  # nn.BatchNorm2d default eps


# --------------------------------------------------------------------------- #
# tiling helpers
# --------------------------------------------------------------------------- #

def _vmem_capacity_bytes():
    try:
        return int(pltpu.get_tpu_info().vmem_capacity_bytes)
    except Exception:
        return 64 << 20          # conservative fallback (v7x physical VMEM per TensorCore)


def _tile_params(n, per_sample_bytes):
    """Largest batch tile (divisor of n) whose per-step VMEM estimate fits ~45% of device
    VMEM, keeping >= 2 grid steps when possible so both v7x TensorCores get work."""
    cap = _vmem_capacity_bytes()
    budget = int(cap * 0.45)
    tn = 1
    for d in range(1, n + 1):
        if n % d:
            continue
        if d * per_sample_bytes > budget:
            continue
        if n >= 2 and n // d < 2:   # keep the "parallel" axis >= 2 steps (v7x megacore)
            continue
        tn = d
    limit = int(min(int(cap * 0.75), max(32 << 20, 2 * tn * per_sample_bytes)))
    cparams = pltpu.CompilerParams(dimension_semantics=("parallel",),
                                   vmem_limit_bytes=limit)
    return tn, cparams


# --------------------------------------------------------------------------- #
# in-kernel building blocks
# --------------------------------------------------------------------------- #

def _zero_pad_hw(x):
    """Zero-pad a [TN, H, W, C] VMEM tile by 1 on each side of H and W (pure VMEM op)."""
    tn, h, w, c = x.shape
    zr = jnp.zeros((tn, 1, w, c), x.dtype)
    x = jnp.concatenate([zr, x, zr], axis=1)
    zc = jnp.zeros((tn, h + 2, 1, c), x.dtype)
    return jnp.concatenate([zc, x, zc], axis=2)


def _im2col_matmul(sources, meta, w_ref, tn, ho, wo, cin):
    """3x3 conv as ONE MXU matmul: gather the 9 shifted taps of the VMEM-resident tile(s),
    concatenate along the contraction dim (K = 9*Cin) and hit the MXU once.

    sources: list of [TN, Hq, Wq, Cin] bf16 tiles (arrays or refs);
    meta[t] = (source index, h offset, w offset) for tap t = 3*kh + kw.
    Returns the f32 [TN*Ho*Wo, Cout_total] accumulator.
    """
    tm = tn * ho * wo
    taps = [sources[p][:, a:a + ho, b:b + wo, :].reshape(tm, cin)
            for (p, a, b) in meta]
    lhs = jnp.concatenate(taps, axis=-1)                     # [TM, 9*Cin] bf16
    return jnp.dot(lhs, w_ref[...], preferred_element_type=jnp.float32)


def _emit_stats(acc3, stats_ref):
    """Packed per-sample (sum, sum-of-squares) side output: [TN, 2, C]."""
    stats_ref[...] = jnp.concatenate(
        [jnp.sum(acc3, axis=1, keepdims=True),
         jnp.sum(acc3 * acc3, axis=1, keepdims=True)], axis=1)


# --------------------------------------------------------------------------- #
# Pallas kernels
# --------------------------------------------------------------------------- #

def conv1_kernel(*refs, meta, num_src, tn, ho, wo, cin, cout, has_down, pad_input):
    """conv1 3x3 (stride s) [+ fused 1x1 downsample] -> raw (pre-BN) outputs + BN stats."""
    srcs = list(refs[:num_src])
    w_ref = refs[num_src]
    y_ref = refs[num_src + 1]
    d_ref = refs[num_src + 2] if has_down else None
    stats_ref = refs[num_src + 2 + int(has_down)]
    if pad_input:  # stride-1 path: zero-pad the raw input tile directly in VMEM
        srcs = [_zero_pad_hw(srcs[0][...].astype(jnp.bfloat16))]
    acc = _im2col_matmul(srcs, meta, w_ref, tn, ho, wo, cin)     # [TM, Ct] f32
    y_ref[...] = acc[:, :cout].reshape(tn, ho, wo, cout).astype(y_ref.dtype)
    if has_down:
        d_ref[...] = acc[:, cout:].reshape(tn, ho, wo, cout).astype(d_ref.dtype)
    _emit_stats(acc.reshape(tn, ho * wo, acc.shape[-1]), stats_ref)


def conv2_kernel(y1_ref, prep_ref, w_ref, y2_ref, stats_ref, *,
                 meta, tn, ho, wo, cin, cout):
    """BN1 (precomputed scale/shift) + ReLU fused into the load, zero-pad in VMEM,
    conv2 3x3 stride 1 as one matmul; emits BN2 / SE-pool statistics."""
    act = y1_ref[...].astype(jnp.float32)
    act = jnp.maximum(act * prep_ref[0:1, :] + prep_ref[1:2, :], 0.0)
    acc = _im2col_matmul([_zero_pad_hw(act.astype(jnp.bfloat16))],
                         meta, w_ref, tn, ho, wo, cin)
    y2_ref[...] = acc.reshape(tn, ho, wo, cout).astype(y2_ref.dtype)
    _emit_stats(acc.reshape(tn, ho * wo, cout), stats_ref)


def se_residual_kernel(y2_ref, res_ref, s_ref, bn2_ref, resp_ref, out_ref):
    """BN2 + SE channel scale + residual-path BN (or identity) + add + ReLU (streaming)."""
    y2 = y2_ref[...].astype(jnp.float32) * bn2_ref[0:1, :] + bn2_ref[1:2, :]
    res = res_ref[...].astype(jnp.float32) * resp_ref[0:1, :] + resp_ref[1:2, :]
    out_ref[...] = jnp.maximum(y2 * s_ref[...] + res, 0.0).astype(out_ref.dtype)


# --------------------------------------------------------------------------- #
# pallas_call wrappers
# --------------------------------------------------------------------------- #

def conv1_call(x_nhwc, w_hwio, stride, w_down=None):
    n, h, w, cin = x_nhwc.shape
    cout = w_hwio.shape[-1]
    has_down = w_down is not None
    ct = 2 * cout if has_down else cout
    ho, wo = h // stride, w // stride
    hw = ho * wo

    # Fused weight [9*Cin, Cout(+Cout)]: 3x3 taps along K; the 1x1 downsample occupies the
    # centre-tap rows of the extra output columns -> one MXU matmul computes both convs.
    wk = jnp.asarray(w_hwio, jnp.float32).reshape(9 * cin, cout)
    if has_down:
        wd = jnp.zeros((9 * cin, cout), jnp.float32)
        wd = wd.at[4 * cin:5 * cin, :].set(
            jnp.asarray(w_down, jnp.float32).reshape(cin, cout))
        wk = jnp.concatenate([wk, wd], axis=1)
    wk = wk.astype(jnp.bfloat16)

    if stride == 1:
        # unpadded input straight from HBM; zero-pad happens on the VMEM tile in-kernel
        meta = tuple((0, kh, kw) for kh in range(3) for kw in range(3))
        srcs = [x_nhwc]
        pad_input = True
    else:
        # stride 2: host-side pad + space-to-depth phase split so every tap is an
        # UNstrided static slice of a VMEM tile.
        # TODO(synk): fold the pad + phase split into the kernel (needs strided VMEM loads).
        xp = jnp.pad(x_nhwc.astype(jnp.bfloat16), ((0, 0), (1, 1), (1, 1), (0, 0)))
        srcs = [xp[:, r::2, c::2, :] for r in range(2) for c in range(2)]
        meta = tuple((2 * (kh % 2) + (kw % 2), kh // 2, kw // 2)
                     for kh in range(3) for kw in range(3))
        pad_input = False

    per_sample = sum(2 * s.shape[1] * s.shape[2] * cin * s.dtype.itemsize for s in srcs)
    per_sample += (h + 2) * (w + 2) * cin * 2 if pad_input else 0     # padded VMEM tile
    per_sample += 2 * hw * 9 * cin * 2                                # im2col taps + operand
    per_sample += hw * ct * 4                                         # f32 accumulator
    per_sample += 2 * (2 if has_down else 1) * hw * cout * 2          # dbl-buffered outputs
    tn, cparams = _tile_params(n, per_sample)

    in_specs = [pl.BlockSpec((tn,) + s.shape[1:], lambda i: (i, 0, 0, 0)) for s in srcs]
    in_specs.append(pl.BlockSpec(wk.shape, lambda i: (0, 0)))

    out_shape = [jax.ShapeDtypeStruct((n, ho, wo, cout), jnp.bfloat16)]
    out_specs = [pl.BlockSpec((tn, ho, wo, cout), lambda i: (i, 0, 0, 0))]
    if has_down:
        out_shape.append(jax.ShapeDtypeStruct((n, ho, wo, cout), jnp.bfloat16))
        out_specs.append(pl.BlockSpec((tn, ho, wo, cout), lambda i: (i, 0, 0, 0)))
    out_shape.append(jax.ShapeDtypeStruct((n, 2, ct), jnp.float32))   # packed sum / sumsq
    out_specs.append(pl.BlockSpec((tn, 2, ct), lambda i: (i, 0, 0)))

    kernel = functools.partial(conv1_kernel, meta=meta, num_src=len(srcs), tn=tn,
                               ho=ho, wo=wo, cin=cin, cout=cout,
                               has_down=has_down, pad_input=pad_input)
    outs = pl.pallas_call(
        kernel,
        grid=(n // tn,),
        in_specs=in_specs,
        out_shape=tuple(out_shape),
        out_specs=tuple(out_specs),
        compiler_params=cparams,
    )(*srcs, wk)
    return outs, ho, wo


def conv2_call(y1_raw, prep1, w_hwio):
    n, ho, wo, cin = y1_raw.shape
    cout = w_hwio.shape[-1]
    hw = ho * wo
    wk = jnp.asarray(w_hwio, jnp.float32).reshape(9 * cin, cout).astype(jnp.bfloat16)
    meta = tuple((0, kh, kw) for kh in range(3) for kw in range(3))

    per_sample = (2 * hw * cin * 2                 # dbl-buffered bf16 input
                  + hw * cin * 4                   # f32 BN+ReLU temporary
                  + (ho + 2) * (wo + 2) * cin * 2  # padded VMEM tile
                  + 2 * hw * 9 * cin * 2           # im2col taps + operand
                  + hw * cout * 4                  # f32 accumulator
                  + 2 * hw * cout * 2)             # dbl-buffered output
    tn, cparams = _tile_params(n, per_sample)

    kernel = functools.partial(conv2_kernel, meta=meta, tn=tn, ho=ho, wo=wo,
                               cin=cin, cout=cout)
    return pl.pallas_call(
        kernel,
        grid=(n // tn,),
        in_specs=[pl.BlockSpec((tn, ho, wo, cin), lambda i: (i, 0, 0, 0)),
                  pl.BlockSpec((2, cin), lambda i: (0, 0)),
                  pl.BlockSpec((9 * cin, cout), lambda i: (0, 0))],
        out_shape=(jax.ShapeDtypeStruct((n, ho, wo, cout), jnp.bfloat16),
                   jax.ShapeDtypeStruct((n, 2, cout), jnp.float32)),
        out_specs=(pl.BlockSpec((tn, ho, wo, cout), lambda i: (i, 0, 0, 0)),
                   pl.BlockSpec((tn, 2, cout), lambda i: (i, 0, 0))),
        compiler_params=cparams,
    )(y1_raw, prep1, wk)


def se_residual_call(y2_raw, res, s, prep2, prep_res):
    n, ho, wo, p = y2_raw.shape
    hw = ho * wo
    per_sample = (2 * hw * p * 2                               # y2 (bf16)
                  + 2 * hw * p * res.dtype.itemsize            # residual
                  + 2 * hw * p * 4                             # f32 output
                  + 3 * hw * p * 4)                            # f32 temporaries
    tn, cparams = _tile_params(n, per_sample)
    s4 = s.astype(jnp.float32).reshape(n, 1, 1, p)
    return pl.pallas_call(
        se_residual_kernel,
        grid=(n // tn,),
        in_specs=[pl.BlockSpec((tn, ho, wo, p), lambda i: (i, 0, 0, 0)),
                  pl.BlockSpec((tn, ho, wo, p), lambda i: (i, 0, 0, 0)),
                  pl.BlockSpec((tn, 1, 1, p), lambda i: (i, 0, 0, 0)),
                  pl.BlockSpec((2, p), lambda i: (0, 0)),
                  pl.BlockSpec((2, p), lambda i: (0, 0))],
        out_shape=jax.ShapeDtypeStruct((n, ho, wo, p), jnp.float32),
        out_specs=pl.BlockSpec((tn, ho, wo, p), lambda i: (i, 0, 0, 0)),
        compiler_params=cparams,
    )(y2_raw, res, s4, prep2, prep_res)


# --------------------------------------------------------------------------- #
# block forward (glue)
# --------------------------------------------------------------------------- #

def _bn_prep(stats, count, gamma, beta):
    """Fold training-mode BN (batch stats, biased variance) into per-channel scale/shift."""
    total = jnp.sum(stats.astype(jnp.float32), axis=0)          # [2, C]
    mean = total[0] / count
    var = jnp.maximum(total[1] / count - mean * mean, 0.0)
    scale = gamma * lax.rsqrt(var + EPS)
    shift = beta - mean * scale
    return jnp.stack([scale, shift], axis=0).astype(jnp.float32)


def cifar_se_basic_block(params, x_nchw):
    x = jnp.transpose(x_nchw, (0, 2, 3, 1)).astype(jnp.float32)    # NCHW -> NHWC
    n = x.shape[0]
    stride = params["stride"]
    planes = params["conv1"].shape[-1]
    has_down = "down_conv" in params

    outs, ho, wo = conv1_call(x, params["conv1"], stride, w_down=params.get("down_conv"))
    count = n * ho * wo
    if has_down:
        y1, dres, stats1 = outs
        prep1 = _bn_prep(stats1[:, :, :planes], count, *params["bn1"])
        prep_res = _bn_prep(stats1[:, :, planes:], count, *params["down_bn"])
        res = dres
    else:
        y1, stats1 = outs
        prep1 = _bn_prep(stats1, count, *params["bn1"])
        prep_res = jnp.stack([jnp.ones((planes,), jnp.float32),
                              jnp.zeros((planes,), jnp.float32)], axis=0)
        res = x                                                    # identity residual

    y2, stats2 = conv2_call(y1, prep1, params["conv2"])
    prep2 = _bn_prep(stats2, count, *params["bn2"])

    # SE branch hoisted to glue: BN2 is a per-channel affine, so
    # bn2(spatial_mean(y2)) == spatial_mean(bn2(y2)); the whole-batch FCs are negligible.
    z = (stats2[:, 0, :] / float(ho * wo)) * prep2[0] + prep2[1]   # [N, planes]
    s = jax.nn.sigmoid(jnp.maximum(z @ params["se_w1"], 0.0) @ params["se_w2"])

    out = se_residual_call(y2, res, s, prep2, prep_res)
    return jnp.transpose(out, (0, 3, 1, 2))                        # NHWC -> NCHW


# --------------------------------------------------------------------------- #
# parameters + pure-JAX f32 reference (numerical sanity check)
# --------------------------------------------------------------------------- #

def _kaiming_conv(key, kh, kw, cin, cout):
    std = (2.0 / (cin * kh * kw)) ** 0.5
    return std * jax.random.normal(key, (kh, kw, cin, cout), jnp.float32)


def _linear_w(key, fan_in, fan_out):
    bound = 1.0 / (fan_in ** 0.5)
    return jax.random.uniform(key, (fan_in, fan_out), jnp.float32, -bound, bound)


def init_block_params(key, inplanes, planes, stride=1, reduction=16):
    keys = jax.random.split(key, 6)
    r = max(planes // reduction, 1)
    params = {
        "stride": stride,
        "conv1": _kaiming_conv(keys[0], 3, 3, inplanes, planes),
        "bn1": (jnp.ones((planes,), jnp.float32), jnp.zeros((planes,), jnp.float32)),
        "conv2": _kaiming_conv(keys[1], 3, 3, planes, planes),
        "bn2": (jnp.ones((planes,), jnp.float32), jnp.zeros((planes,), jnp.float32)),
        "se_w1": _linear_w(keys[2], planes, r),
        "se_w2": _linear_w(keys[3], r, planes),
    }
    if inplanes != planes:
        params["down_conv"] = _kaiming_conv(keys[4], 1, 1, inplanes, planes)
        params["down_bn"] = (jnp.ones((planes,), jnp.float32),
                             jnp.zeros((planes,), jnp.float32))
    return params


def _ref_conv(x_nhwc, w_hwio, stride, pad):
    return lax.conv_general_dilated(x_nhwc, w_hwio, (stride, stride),
                                    ((pad, pad), (pad, pad)),
                                    dimension_numbers=("NHWC", "HWIO", "NHWC"))


def _ref_bn(y, gamma, beta):
    mean = jnp.mean(y, axis=(0, 1, 2))
    var = jnp.mean(jnp.square(y - mean), axis=(0, 1, 2))
    return (y - mean) * lax.rsqrt(var + EPS) * gamma + beta


def reference_block(params, x_nchw):
    x = jnp.transpose(x_nchw, (0, 2, 3, 1)).astype(jnp.float32)
    stride = params["stride"]
    if "down_conv" in params:
        residual = _ref_bn(_ref_conv(x, params["down_conv"], stride, 0), *params["down_bn"])
    else:
        residual = x
    out = jnp.maximum(_ref_bn(_ref_conv(x, params["conv1"], stride, 1), *params["bn1"]), 0.0)
    out = _ref_bn(_ref_conv(out, params["conv2"], 1, 1), *params["bn2"])
    pooled = jnp.mean(out, axis=(1, 2))
    hvec = jnp.maximum(pooled @ params["se_w1"], 0.0)
    s = jax.nn.sigmoid(hvec @ params["se_w2"])
    out = jnp.maximum(out * s[:, None, None, :] + residual, 0.0)
    return jnp.transpose(out, (0, 3, 1, 2))


# --------------------------------------------------------------------------- #

if __name__ == "__main__":
    key = jax.random.PRNGKey(0)
    kp1, kp2, kx1, kx2 = jax.random.split(key, 4)

    # Config A: downsample path (inplanes != planes, stride 2), NCHW input.
    params_a = init_block_params(kp1, inplanes=16, planes=32, stride=2, reduction=16)
    x_a = jax.random.normal(kx1, (2, 16, 16, 16), jnp.float32)
    out_a = jax.jit(lambda inp: cifar_se_basic_block(params_a, inp))(x_a)
    jax.block_until_ready(out_a)
    assert out_a.shape == (2, 32, 8, 8) and out_a.dtype == jnp.float32

    # Config B: identity-residual path (inplanes == planes, stride 1).
    params_b = init_block_params(kp2, inplanes=32, planes=32, stride=1, reduction=16)
    x_b = jax.random.normal(kx2, (2, 32, 8, 8), jnp.float32)
    out_b = jax.jit(lambda inp: cifar_se_basic_block(params_b, inp))(x_b)
    jax.block_until_ready(out_b)
    assert out_b.shape == (2, 32, 8, 8)

    # Numerical sanity vs. a pure-f32 JAX reference (kernel uses bf16 MXU operands -> loose tol).
    err_a = float(jnp.max(jnp.abs(out_a - reference_block(params_a, x_a))))
    err_b = float(jnp.max(jnp.abs(out_b - reference_block(params_b, x_b))))
    assert err_a < 0.35 and err_b < 0.35, (err_a, err_b)
    assert bool(jnp.all(jnp.isfinite(out_a))) and bool(jnp.all(jnp.isfinite(out_b)))

    print("KERNEL_OK")
</pallas_src>

<mosaic_0001>
module attributes {stable_mosaic.version = 11 : i64} {
  func.func @conv1_kernel(%arg0: i32, %arg1: memref<1x9x9x16xbf16, #tpu.memory_space<vmem>>, %arg2: memref<1x9x9x16xbf16, #tpu.memory_space<vmem>>, %arg3: memref<1x9x9x16xbf16, #tpu.memory_space<vmem>>, %arg4: memref<1x9x9x16xbf16, #tpu.memory_space<vmem>>, %arg5: memref<144x64xbf16, #tpu.memory_space<vmem>>, %arg6: memref<1x8x8x32xbf16, #tpu.memory_space<vmem>>, %arg7: memref<1x8x8x32xbf16, #tpu.memory_space<vmem>>, %arg8: memref<1x2x64xf32, #tpu.memory_space<vmem>>) attributes {dimension_semantics = [#tpu.dimension_semantics<parallel>], iteration_bounds = array<i64: 2>, scalar_prefetch = 0 : i64, scratch_operands = 0 : i64, tpu.core_type = #tpu.core_type<tc>, window_params = [{transform_indices = @transform_0, window_bounds = array<i64: 1, 9, 9, 16>}, {transform_indices = @transform_1, window_bounds = array<i64: 1, 9, 9, 16>}, {transform_indices = @transform_2, window_bounds = array<i64: 1, 9, 9, 16>}, {transform_indices = @transform_3, window_bounds = array<i64: 1, 9, 9, 16>}, {pipeline_mode = #tpu.pipeline_mode<synchronous>, transform_indices = @transform_4, window_bounds = array<i64: 144, 64>}, {transform_indices = @transform_5, window_bounds = array<i64: 1, 8, 8, 32>}, {transform_indices = @transform_6, window_bounds = array<i64: 1, 8, 8, 32>}, {transform_indices = @transform_7, window_bounds = array<i64: 1, 2, 64>}]} {
    %c0 = arith.constant 0 : index
    %c0_0 = arith.constant 0 : index
    %c0_1 = arith.constant 0 : index
    %c0_2 = arith.constant 0 : index
    %0 = vector.load %arg1[%c0, %c0_0, %c0_1, %c0_2] : memref<1x9x9x16xbf16, #tpu.memory_space<vmem>>, vector<1x8x8x16xbf16>
    %1 = vector.shape_cast %0 : vector<1x8x8x16xbf16> to vector<64x16xbf16>
    %c0_3 = arith.constant 0 : index
    %c0_4 = arith.constant 0 : index
    %c0_5 = arith.constant 0 : index
    %c0_6 = arith.constant 0 : index
    %2 = vector.load %arg2[%c0_3, %c0_4, %c0_5, %c0_6] : memref<1x9x9x16xbf16, #tpu.memory_space<vmem>>, vector<1x8x8x16xbf16>
    %3 = vector.shape_cast %2 : vector<1x8x8x16xbf16> to vector<64x16xbf16>
    %c0_7 = arith.constant 0 : index
    %c0_8 = arith.constant 0 : index
    %c1 = arith.constant 1 : index
    %c0_9 = arith.constant 0 : index
    %4 = vector.load %arg1[%c0_7, %c0_8, %c1, %c0_9] : memref<1x9x9x16xbf16, #tpu.memory_space<vmem>>, vector<1x8x8x16xbf16>
    %5 = vector.shape_cast %4 : vector<1x8x8x16xbf16> to vector<64x16xbf16>
    %c0_10 = arith.constant 0 : index
    %c0_11 = arith.constant 0 : index
    %c0_12 = arith.constant 0 : index
    %c0_13 = arith.constant 0 : index
    %6 = vector.load %arg3[%c0_10, %c0_11, %c0_12, %c0_13] : memref<1x9x9x16xbf16, #tpu.memory_space<vmem>>, vector<1x8x8x16xbf16>
    %7 = vector.shape_cast %6 : vector<1x8x8x16xbf16> to vector<64x16xbf16>
    %c0_14 = arith.constant 0 : index
    %c0_15 = arith.constant 0 : index
    %c0_16 = arith.constant 0 : index
    %c0_17 = arith.constant 0 : index
    %8 = vector.load %arg4[%c0_14, %c0_15, %c0_16, %c0_17] : memref<1x9x9x16xbf16, #tpu.memory_space<vmem>>, vector<1x8x8x16xbf16>
    %9 = vector.shape_cast %8 : vector<1x8x8x16xbf16> to vector<64x16xbf16>
    %c0_18 = arith.constant 0 : index
    %c0_19 = arith.constant 0 : index
    %c1_20 = arith.constant 1 : index
    %c0_21 = arith.constant 0 : index
    %10 = vector.load %arg3[%c0_18, %c0_19, %c1_20, %c0_21] : memref<1x9x9x16xbf16, #tpu.memory_space<vmem>>, vector<1x8x8x16xbf16>
    %11 = vector.shape_cast %10 : vector<1x8x8x16xbf16> to vector<64x16xbf16>
    %c0_22 = arith.constant 0 : index
    %c1_23 = arith.constant 1 : index
    %c0_24 = arith.constant 0 : index
    %c0_25 = arith.constant 0 : index
    %12 = vector.load %arg1[%c0_22, %c1_23, %c0_24, %c0_25] : memref<1x9x9x16xbf16, #tpu.memory_space<vmem>>, vector<1x8x8x16xbf16>
    %13 = vector.shape_cast %12 : vector<1x8x8x16xbf16> to vector<64x16xbf16>
    %c0_26 = arith.constant 0 : index
    %c1_27 = arith.constant 1 : index
    %c0_28 = arith.constant 0 : index
    %c0_29 = arith.constant 0 : index
    %14 = vector.load %arg2[%c0_26, %c1_27, %c0_28, %c0_29] : memref<1x9x9x16xbf16, #tpu.memory_space<vmem>>, vector<1x8x8x16xbf16>
    %15 = vector.shape_cast %14 : vector<1x8x8x16xbf16> to vector<64x16xbf16>
    %c0_30 = arith.constant 0 : index
    %c1_31 = arith.constant 1 : index
    %c1_32 = arith.constant 1 : index
    %c0_33 = arith.constant 0 : index
    %16 = vector.load %arg1[%c0_30, %c1_31, %c1_32, %c0_33] : memref<1x9x9x16xbf16, #tpu.memory_space<vmem>>, vector<1x8x8x16xbf16>
    %17 = vector.shape_cast %16 : vector<1x8x8x16xbf16> to vector<64x16xbf16>
    %18 = tpu.concatenate %1, %3, %5, %7, %9, %11, %13, %15, %17 in 1 : vector<64x16xbf16>, vector<64x16xbf16>, vector<64x16xbf16>, vector<64x16xbf16>, vector<64x16xbf16>, vector<64x16xbf16>, vector<64x16xbf16>, vector<64x16xbf16>, vector<64x16xbf16> -> vector<64x144xbf16>
    %c0_34 = arith.constant 0 : index
    %c0_35 = arith.constant 0 : index
    %19 = vector.load %arg5[%c0_34, %c0_35] : memref<144x64xbf16, #tpu.memory_space<vmem>>, vector<144x64xbf16>
    %cst = arith.constant dense<0.000000e+00> : vector<64x64xf32>
    %20 = tpu.matmul %18, %19, %cst {dimension_numbers = #tpu.dot_dimension_numbers<[1], [0], [0], [1], [0, 0, 1, 1], [], []>} : vector<64x144xbf16>, vector<144x64xbf16>, vector<64x64xf32> -> vector<64x64xf32>
    %21 = vector.extract_strided_slice %20 {offsets = [0, 0], sizes = [64, 32], strides = [1, 1]} : vector<64x64xf32> to vector<64x32xf32>
    %22 = vector.shape_cast %21 : vector<64x32xf32> to vector<1x8x8x32xf32>
    %23 = arith.truncf %22 : vector<1x8x8x32xf32> to vector<1x8x8x32xbf16>
    %c0_36 = arith.constant 0 : index
    %c0_37 = arith.constant 0 : index
    %c0_38 = arith.constant 0 : index
    %c0_39 = arith.constant 0 : index
    %24 = vector.load %arg6[%c0_36, %c0_37, %c0_38, %c0_39] : memref<1x8x8x32xbf16, #tpu.memory_space<vmem>>, vector<1x8x8x32xbf16>
    tpu.vector_store %arg6[%c0_36, %c0_37, %c0_38, %c0_39], %23 {strides = array<i32>} : memref<1x8x8x32xbf16, #tpu.memory_space<vmem>>, vector<1x8x8x32xbf16>,
    %25 = vector.extract_strided_slice %20 {offsets = [0, 32], sizes = [64, 32], strides = [1, 1]} : vector<64x64xf32> to vector<64x32xf32>
    %26 = vector.shape_cast %25 : vector<64x32xf32> to vector<1x8x8x32xf32>
    %27 = arith.truncf %26 : vector<1x8x8x32xf32> to vector<1x8x8x32xbf16>
    %c0_40 = arith.constant 0 : index
    %c0_41 = arith.constant 0 : index
    %c0_42 = arith.constant 0 : index
    %c0_43 = arith.constant 0 : index
    %28 = vector.load %arg7[%c0_40, %c0_41, %c0_42, %c0_43] : memref<1x8x8x32xbf16, #tpu.memory_space<vmem>>, vector<1x8x8x32xbf16>
    tpu.vector_store %arg7[%c0_40, %c0_41, %c0_42, %c0_43], %27 {strides = array<i32>} : memref<1x8x8x32xbf16, #tpu.memory_space<vmem>>, vector<1x8x8x32xbf16>,
    %29 = vector.shape_cast %20 : vector<64x64xf32> to vector<1x64x64xf32>
    %cst_44 = arith.constant dense<0.000000e+00> : vector<1x64xf32>
    %30 = vector.multi_reduction <add>, %29, %cst_44 [1] : vector<1x64x64xf32> to vector<1x64xf32>
    %31 = vector.shape_cast %30 : vector<1x64xf32> to vector<1x1x64xf32>
    %32 = arith.mulf %29, %29 : vector<1x64x64xf32>
    %cst_45 = arith.constant dense<0.000000e+00> : vector<1x64xf32>
    %33 = vector.multi_reduction <add>, %32, %cst_45 [1] : vector<1x64x64xf32> to vector<1x64xf32>
    %34 = vector.shape_cast %33 : vector<1x64xf32> to vector<1x1x64xf32>
    %35 = tpu.concatenate %31, %34 in 1 : vector<1x1x64xf32>, vector<1x1x64xf32> -> vector<1x2x64xf32>
    %c0_46 = arith.constant 0 : index
    %c0_47 = arith.constant 0 : index
    %c0_48 = arith.constant 0 : index
    %36 = vector.load %arg8[%c0_46, %c0_47, %c0_48] : memref<1x2x64xf32, #tpu.memory_space<vmem>>, vector<1x2x64xf32>
    tpu.vector_store %arg8[%c0_46, %c0_47, %c0_48], %35 {strides = array<i32>} : memref<1x2x64xf32, #tpu.memory_space<vmem>>, vector<1x2x64xf32>,
    return
  }
  func.func @transform_0(%arg0: i32) -> (i32, i32, i32, i32) {
    %c0_i32 = arith.constant 0 : i32
    %c0_i32_0 = arith.constant 0 : i32
    %c0_i32_1 = arith.constant 0 : i32
    %c0_i32_2 = arith.constant 0 : i32
    return %arg0, %c0_i32, %c0_i32_0, %c0_i32_1 : i32, i32, i32, i32
  }
  func.func @transform_1(%arg0: i32) -> (i32, i32, i32, i32) {
    %c0_i32 = arith.constant 0 : i32
    %c0_i32_0 = arith.constant 0 : i32
    %c0_i32_1 = arith.constant 0 : i32
    %c0_i32_2 = arith.constant 0 : i32
    return %arg0, %c0_i32, %c0_i32_0, %c0_i32_1 : i32, i32, i32, i32
  }
  func.func @transform_2(%arg0: i32) -> (i32, i32, i32, i32) {
    %c0_i32 = arith.constant 0 : i32
    %c0_i32_0 = arith.constant 0 : i32
    %c0_i32_1 = arith.constant 0 : i32
    %c0_i32_2 = arith.constant 0 : i32
    return %arg0, %c0_i32, %c0_i32_0, %c0_i32_1 : i32, i32, i32, i32
  }
  func.func @transform_3(%arg0: i32) -> (i32, i32, i32, i32) {
    %c0_i32 = arith.constant 0 : i32
    %c0_i32_0 = arith.constant 0 : i32
    %c0_i32_1 = arith.constant 0 : i32
    %c0_i32_2 = arith.constant 0 : i32
    return %arg0, %c0_i32, %c0_i32_0, %c0_i32_1 : i32, i32, i32, i32
  }
  func.func @transform_4(%arg0: i32) -> (i32, i32) {
    %c0_i32 = arith.constant 0 : i32
    %c0_i32_0 = arith.constant 0 : i32
    %c0_i32_1 = arith.constant 0 : i32
    return %c0_i32, %c0_i32_0 : i32, i32
  }
  func.func @transform_5(%arg0: i32) -> (i32, i32, i32, i32) {
    %c0_i32 = arith.constant 0 : i32
    %c0_i32_0 = arith.constant 0 : i32
    %c0_i32_1 = arith.constant 0 : i32
    %c0_i32_2 = arith.constant 0 : i32
    return %arg0, %c0_i32, %c0_i32_0, %c0_i32_1 : i32, i32, i32, i32
  }
  func.func @transform_6(%arg0: i32) -> (i32, i32, i32, i32) {
    %c0_i32 = arith.constant 0 : i32
    %c0_i32_0 = arith.constant 0 : i32
    %c0_i32_1 = arith.constant 0 : i32
    %c0_i32_2 = arith.constant 0 : i32
    return %arg0, %c0_i32, %c0_i32_0, %c0_i32_1 : i32, i32, i32, i32
  }
  func.func @transform_7(%arg0: i32) -> (i32, i32, i32) {
    %c0_i32 = arith.constant 0 : i32
    %c0_i32_0 = arith.constant 0 : i32
    %c0_i32_1 = arith.constant 0 : i32
    return %arg0, %c0_i32, %c0_i32_0 : i32, i32, i32
  }
}

module attributes {stable_mosaic.version = 11 : i64} {
  func.func @conv2_kernel(%arg0: i32, %arg1: memref<1x8x8x32xbf16, #tpu.memory_space<vmem>>, %arg2: memref<2x32xf32, #tpu.memory_space<vmem>>, %arg3: memref<288x32xbf16, #tpu.memory_space<vmem>>, %arg4: memref<1x8x8x32xbf16, #tpu.memory_space<vmem>>, %arg5: memref<1x2x32xf32, #tpu.memory_space<vmem>>) attributes {dimension_semantics = [#tpu.dimension_semantics<parallel>], iteration_bounds = array<i64: 2>, scalar_prefetch = 0 : i64, scratch_operands = 0 : i64, tpu.core_type = #tpu.core_type<tc>, window_params = [{transform_indices = @transform_0, window_bounds = array<i64: 1, 8, 8, 32>}, {pipeline_mode = #tpu.pipeline_mode<synchronous>, transform_indices = @transform_1, window_bounds = array<i64: 2, 32>}, {pipeline_mode = #tpu.pipeline_mode<synchronous>, transform_indices = @transform_2, window_bounds = array<i64: 288, 32>}, {transform_indices = @transform_3, window_bounds = array<i64: 1, 8, 8, 32>}, {transform_indices = @transform_4, window_bounds = array<i64: 1, 2, 32>}]} {
    %c0 = arith.constant 0 : index
    %c0_0 = arith.constant 0 : index
    %c0_1 = arith.constant 0 : index
    %c0_2 = arith.constant 0 : index
    %0 = vector.load %arg1[%c0, %c0_0, %c0_1, %c0_2] : memref<1x8x8x32xbf16, #tpu.memory_space<vmem>>, vector<1x8x8x32xbf16>
    %1 = arith.extf %0 : vector<1x8x8x32xbf16> to vector<1x8x8x32xf32>
    %c0_3 = arith.constant 0 : index
    %c0_4 = arith.constant 0 : index
    %2 = vector.load %arg2[%c0_3, %c0_4] : memref<2x32xf32, #tpu.memory_space<vmem>>, vector<1x32xf32>
    %3 = vector.shape_cast %2 : vector<1x32xf32> to vector<1x1x1x32xf32>
    %4 = vector.broadcast %3 : vector<1x1x1x32xf32> to vector<1x8x8x32xf32>
    %5 = arith.mulf %1, %4 : vector<1x8x8x32xf32>
    %c1 = arith.constant 1 : index
    %c0_5 = arith.constant 0 : index
    %6 = vector.load %arg2[%c1, %c0_5] : memref<2x32xf32, #tpu.memory_space<vmem>>, vector<1x32xf32>
    %7 = vector.shape_cast %6 : vector<1x32xf32> to vector<1x1x1x32xf32>
    %8 = vector.broadcast %7 : vector<1x1x1x32xf32> to vector<1x8x8x32xf32>
    %9 = arith.addf %5, %8 : vector<1x8x8x32xf32>
    %cst = arith.constant 0.000000e+00 : f32
    %10 = vector.broadcast %cst : f32 to vector<1x8x8x32xf32>
    %11 = arith.maximumf %9, %10 : vector<1x8x8x32xf32>
    %12 = arith.truncf %11 : vector<1x8x8x32xf32> to vector<1x8x8x32xbf16>
    %cst_6 = arith.constant 0.000000e+00 : bf16
    %13 = vector.broadcast %cst_6 : bf16 to vector<1x1x8x32xbf16>
    %14 = tpu.concatenate %13, %12, %13 in 1 : vector<1x1x8x32xbf16>, vector<1x8x8x32xbf16>, vector<1x1x8x32xbf16> -> vector<1x10x8x32xbf16>
    %cst_7 = arith.constant 0.000000e+00 : bf16
    %15 = vector.broadcast %cst_7 : bf16 to vector<1x10x1x32xbf16>
    %16 = tpu.concatenate %15, %14, %15 in 2 : vector<1x10x1x32xbf16>, vector<1x10x8x32xbf16>, vector<1x10x1x32xbf16> -> vector<1x10x10x32xbf16>
    %17 = vector.extract_strided_slice %16 {offsets = [0, 0, 0, 0], sizes = [1, 8, 8, 32], strides = [1, 1, 1, 1]} : vector<1x10x10x32xbf16> to vector<1x8x8x32xbf16>
    %18 = vector.shape_cast %17 : vector<1x8x8x32xbf16> to vector<64x32xbf16>
    %19 = vector.extract_strided_slice %16 {offsets = [0, 0, 1, 0], sizes = [1, 8, 8, 32], strides = [1, 1, 1, 1]} : vector<1x10x10x32xbf16> to vector<1x8x8x32xbf16>
    %20 = vector.shape_cast %19 : vector<1x8x8x32xbf16> to vector<64x32xbf16>
    %21 = vector.extract_strided_slice %16 {offsets = [0, 0, 2, 0], sizes = [1, 8, 8, 32], strides = [1, 1, 1, 1]} : vector<1x10x10x32xbf16> to vector<1x8x8x32xbf16>
    %22 = vector.shape_cast %21 : vector<1x8x8x32xbf16> to vector<64x32xbf16>
    %23 = vector.extract_strided_slice %16 {offsets = [0, 1, 0, 0], sizes = [1, 8, 8, 32], strides = [1, 1, 1, 1]} : vector<1x10x10x32xbf16> to vector<1x8x8x32xbf16>
    %24 = vector.shape_cast %23 : vector<1x8x8x32xbf16> to vector<64x32xbf16>
    %25 = vector.extract_strided_slice %16 {offsets = [0, 1, 1, 0], sizes = [1, 8, 8, 32], strides = [1, 1, 1, 1]} : vector<1x10x10x32xbf16> to vector<1x8x8x32xbf16>
    %26 = vector.shape_cast %25 : vector<1x8x8x32xbf16> to vector<64x32xbf16>
    %27 = vector.extract_strided_slice %16 {offsets = [0, 1, 2, 0], sizes = [1, 8, 8, 32], strides = [1, 1, 1, 1]} : vector<1x10x10x32xbf16> to vector<1x8x8x32xbf16>
    %28 = vector.shape_cast %27 : vector<1x8x8x32xbf16> to vector<64x32xbf16>
    %29 = vector.extract_strided_slice %16 {offsets = [0, 2, 0, 0], sizes = [1, 8, 8, 32], strides = [1, 1, 1, 1]} : vector<1x10x10x32xbf16> to vector<1x8x8x32xbf16>
    %30 = vector.shape_cast %29 : vector<1x8x8x32xbf16> to vector<64x32xbf16>
    %31 = vector.extract_strided_slice %16 {offsets = [0, 2, 1, 0], sizes = [1, 8, 8, 32], strides = [1, 1, 1, 1]} : vector<1x10x10x32xbf16> to vector<1x8x8x32xbf16>
    %32 = vector.shape_cast %31 : vector<1x8x8x32xbf16> to vector<64x32xbf16>
    %33 = vector.extract_strided_slice %16 {offsets = [0, 2, 2, 0], sizes = [1, 8, 8, 32], strides = [1, 1, 1, 1]} : vector<1x10x10x32xbf16> to vector<1x8x8x32xbf16>
    %34 = vector.shape_cast %33 : vector<1x8x8x32xbf16> to vector<64x32xbf16>
    %35 = tpu.concatenate %18, %20, %22, %24, %26, %28, %30, %32, %34 in 1 : vector<64x32xbf16>, vector<64x32xbf16>, vector<64x32xbf16>, vector<64x32xbf16>, vector<64x32xbf16>, vector<64x32xbf16>, vector<64x32xbf16>, vector<64x32xbf16>, vector<64x32xbf16> -> vector<64x288xbf16>
    %c0_8 = arith.constant 0 : index
    %c0_9 = arith.constant 0 : index
    %36 = vector.load %arg3[%c0_8, %c0_9] : memref<288x32xbf16, #tpu.memory_space<vmem>>, vector<288x32xbf16>
    %cst_10 = arith.constant dense<0.000000e+00> : vector<64x32xf32>
    %37 = tpu.matmul %35, %36, %cst_10 {dimension_numbers = #tpu.dot_dimension_numbers<[1], [0], [0], [1], [0, 0, 1, 1], [], []>} : vector<64x288xbf16>, vector<288x32xbf16>, vector<64x32xf32> -> vector<64x32xf32>
    %38 = vector.shape_cast %37 : vector<64x32xf32> to vector<1x8x8x32xf32>
    %39 = arith.truncf %38 : vector<1x8x8x32xf32> to vector<1x8x8x32xbf16>
    %c0_11 = arith.constant 0 : index
    %c0_12 = arith.constant 0 : index
    %c0_13 = arith.constant 0 : index
    %c0_14 = arith.constant 0 : index
    %40 = vector.load %arg4[%c0_11, %c0_12, %c0_13, %c0_14] : memref<1x8x8x32xbf16, #tpu.memory_space<vmem>>, vector<1x8x8x32xbf16>
    tpu.vector_store %arg4[%c0_11, %c0_12, %c0_13, %c0_14], %39 {strides = array<i32>} : memref<1x8x8x32xbf16, #tpu.memory_space<vmem>>, vector<1x8x8x32xbf16>,
    %41 = vector.shape_cast %37 : vector<64x32xf32> to vector<1x64x32xf32>
    %cst_15 = arith.constant dense<0.000000e+00> : vector<1x32xf32>
    %42 = vector.multi_reduction <add>, %41, %cst_15 [1] : vector<1x64x32xf32> to vector<1x32xf32>
    %43 = vector.shape_cast %42 : vector<1x32xf32> to vector<1x1x32xf32>
    %44 = arith.mulf %41, %41 : vector<1x64x32xf32>
    %cst_16 = arith.constant dense<0.000000e+00> : vector<1x32xf32>
    %45 = vector.multi_reduction <add>, %44, %cst_16 [1] : vector<1x64x32xf32> to vector<1x32xf32>
    %46 = vector.shape_cast %45 : vector<1x32xf32> to vector<1x1x32xf32>
    %47 = tpu.concatenate %43, %46 in 1 : vector<1x1x32xf32>, vector<1x1x32xf32> -> vector<1x2x32xf32>
    %c0_17 = arith.constant 0 : index
    %c0_18 = arith.constant 0 : index
    %c0_19 = arith.constant 0 : index
    %48 = vector.load %arg5[%c0_17, %c0_18, %c0_19] : memref<1x2x32xf32, #tpu.memory_space<vmem>>, vector<1x2x32xf32>
    tpu.vector_store %arg5[%c0_17, %c0_18, %c0_19], %47 {strides = array<i32>} : memref<1x2x32xf32, #tpu.memory_space<vmem>>, vector<1x2x32xf32>,
    return
  }
  func.func @transform_0(%arg0: i32) -> (i32, i32, i32, i32) {
    %c0_i32 = arith.constant 0 : i32
    %c0_i32_0 = arith.constant 0 : i32
    %c0_i32_1 = arith.constant 0 : i32
    %c0_i32_2 = arith.constant 0 : i32
    return %arg0, %c0_i32, %c0_i32_0, %c0_i32_1 : i32, i32, i32, i32
  }
  func.func @transform_1(%arg0: i32) -> (i32, i32) {
    %c0_i32 = arith.constant 0 : i32
    %c0_i32_0 = arith.constant 0 : i32
    %c0_i32_1 = arith.constant 0 : i32
    return %c0_i32, %c0_i32_0 : i32, i32
  }
  func.func @transform_2(%arg0: i32) -> (i32, i32) {
    %c0_i32 = arith.constant 0 : i32
    %c0_i32_0 = arith.constant 0 : i32
    %c0_i32_1 = arith.constant 0 : i32
    return %c0_i32, %c0_i32_0 : i32, i32
  }
  func.func @transform_3(%arg0: i32) -> (i32, i32, i32, i32) {
    %c0_i32 = arith.constant 0 : i32
    %c0_i32_0 = arith.constant 0 : i32
    %c0_i32_1 = arith.constant 0 : i32
    %c0_i32_2 = arith.constant 0 : i32
    return %arg0, %c0_i32, %c0_i32_0, %c0_i32_1 : i32, i32, i32, i32
  }
  func.func @transform_4(%arg0: i32) -> (i32, i32, i32) {
    %c0_i32 = arith.constant 0 : i32
    %c0_i32_0 = arith.constant 0 : i32
    %c0_i32_1 = arith.constant 0 : i32
    return %arg0, %c0_i32, %c0_i32_0 : i32, i32, i32
  }
}

module attributes {stable_mosaic.version = 11 : i64} {
  func.func @se_residual_kernel(%arg0: i32, %arg1: memref<1x8x8x32xbf16, #tpu.memory_space<vmem>>, %arg2: memref<1x8x8x32xbf16, #tpu.memory_space<vmem>>, %arg3: memref<1x1x1x32xf32, #tpu.memory_space<vmem>>, %arg4: memref<2x32xf32, #tpu.memory_space<vmem>>, %arg5: memref<2x32xf32, #tpu.memory_space<vmem>>, %arg6: memref<1x8x8x32xf32, #tpu.memory_space<vmem>>) attributes {dimension_semantics = [#tpu.dimension_semantics<parallel>], iteration_bounds = array<i64: 2>, scalar_prefetch = 0 : i64, scratch_operands = 0 : i64, tpu.core_type = #tpu.core_type<tc>, window_params = [{transform_indices = @transform_0, window_bounds = array<i64: 1, 8, 8, 32>}, {transform_indices = @transform_1, window_bounds = array<i64: 1, 8, 8, 32>}, {transform_indices = @transform_2, window_bounds = array<i64: 1, 1, 1, 32>}, {pipeline_mode = #tpu.pipeline_mode<synchronous>, transform_indices = @transform_3, window_bounds = array<i64: 2, 32>}, {pipeline_mode = #tpu.pipeline_mode<synchronous>, transform_indices = @transform_4, window_bounds = array<i64: 2, 32>}, {transform_indices = @transform_5, window_bounds = array<i64: 1, 8, 8, 32>}]} {
    %c0 = arith.constant 0 : index
    %c0_0 = arith.constant 0 : index
    %c0_1 = arith.constant 0 : index
    %c0_2 = arith.constant 0 : index
    %0 = vector.load %arg1[%c0, %c0_0, %c0_1, %c0_2] : memref<1x8x8x32xbf16, #tpu.memory_space<vmem>>, vector<1x8x8x32xbf16>
    %1 = arith.extf %0 : vector<1x8x8x32xbf16> to vector<1x8x8x32xf32>
    %c0_3 = arith.constant 0 : index
    %c0_4 = arith.constant 0 : index
    %2 = vector.load %arg4[%c0_3, %c0_4] : memref<2x32xf32, #tpu.memory_space<vmem>>, vector<1x32xf32>
    %3 = vector.shape_cast %2 : vector<1x32xf32> to vector<1x1x1x32xf32>
    %4 = vector.broadcast %3 : vector<1x1x1x32xf32> to vector<1x8x8x32xf32>
    %5 = arith.mulf %1, %4 : vector<1x8x8x32xf32>
    %c1 = arith.constant 1 : index
    %c0_5 = arith.constant 0 : index
    %6 = vector.load %arg4[%c1, %c0_5] : memref<2x32xf32, #tpu.memory_space<vmem>>, vector<1x32xf32>
    %7 = vector.shape_cast %6 : vector<1x32xf32> to vector<1x1x1x32xf32>
    %8 = vector.broadcast %7 : vector<1x1x1x32xf32> to vector<1x8x8x32xf32>
    %9 = arith.addf %5, %8 : vector<1x8x8x32xf32>
    %c0_6 = arith.constant 0 : index
    %c0_7 = arith.constant 0 : index
    %c0_8 = arith.constant 0 : index
    %c0_9 = arith.constant 0 : index
    %10 = vector.load %arg2[%c0_6, %c0_7, %c0_8, %c0_9] : memref<1x8x8x32xbf16, #tpu.memory_space<vmem>>, vector<1x8x8x32xbf16>
    %11 = arith.extf %10 : vector<1x8x8x32xbf16> to vector<1x8x8x32xf32>
    %c0_10 = arith.constant 0 : index
    %c0_11 = arith.constant 0 : index
    %12 = vector.load %arg5[%c0_10, %c0_11] : memref<2x32xf32, #tpu.memory_space<vmem>>, vector<1x32xf32>
    %13 = vector.shape_cast %12 : vector<1x32xf32> to vector<1x1x1x32xf32>
    %14 = vector.broadcast %13 : vector<1x1x1x32xf32> to vector<1x8x8x32xf32>
    %15 = arith.mulf %11, %14 : vector<1x8x8x32xf32>
    %c1_12 = arith.constant 1 : index
    %c0_13 = arith.constant 0 : index
    %16 = vector.load %arg5[%c1_12, %c0_13] : memref<2x32xf32, #tpu.memory_space<vmem>>, vector<1x32xf32>
    %17 = vector.shape_cast %16 : vector<1x32xf32> to vector<1x1x1x32xf32>
    %18 = vector.broadcast %17 : vector<1x1x1x32xf32> to vector<1x8x8x32xf32>
    %19 = arith.addf %15, %18 : vector<1x8x8x32xf32>
    %c0_14 = arith.constant 0 : index
    %c0_15 = arith.constant 0 : index
    %c0_16 = arith.constant 0 : index
    %c0_17 = arith.constant 0 : index
    %20 = vector.load %arg3[%c0_14, %c0_15, %c0_16, %c0_17] : memref<1x1x1x32xf32, #tpu.memory_space<vmem>>, vector<1x1x1x32xf32>
    %21 = vector.broadcast %20 : vector<1x1x1x32xf32> to vector<1x8x8x32xf32>
    %22 = arith.mulf %9, %21 : vector<1x8x8x32xf32>
    %23 = arith.addf %22, %19 : vector<1x8x8x32xf32>
    %cst = arith.constant 0.000000e+00 : f32
    %24 = vector.broadcast %cst : f32 to vector<1x8x8x32xf32>
    %25 = arith.maximumf %23, %24 : vector<1x8x8x32xf32>
    %c0_18 = arith.constant 0 : index
    %c0_19 = arith.constant 0 : index
    %c0_20 = arith.constant 0 : index
    %c0_21 = arith.constant 0 : index
    %26 = vector.load %arg6[%c0_18, %c0_19, %c0_20, %c0_21] : memref<1x8x8x32xf32, #tpu.memory_space<vmem>>, vector<1x8x8x32xf32>
    tpu.vector_store %arg6[%c0_18, %c0_19, %c0_20, %c0_21], %25 {strides = array<i32>} : memref<1x8x8x32xf32, #tpu.memory_space<vmem>>, vector<1x8x8x32xf32>,
    return
  }
  func.func @transform_0(%arg0: i32) -> (i32, i32, i32, i32) {
    %c0_i32 = arith.constant 0 : i32
    %c0_i32_0 = arith.constant 0 : i32
    %c0_i32_1 = arith.constant 0 : i32
    %c0_i32_2 = arith.constant 0 : i32
    return %arg0, %c0_i32, %c0_i32_0, %c0_i32_1 : i32, i32, i32, i32
  }
  func.func @transform_1(%arg0: i32) -> (i32, i32, i32, i32) {
    %c0_i32 = arith.constant 0 : i32
    %c0_i32_0 = arith.constant 0 : i32
    %c0_i32_1 = arith.constant 0 : i32
    %c0_i32_2 = arith.constant 0 : i32
    return %arg0, %c0_i32, %c0_i32_0, %c0_i32_1 : i32, i32, i32, i32
  }
  func.func @transform_2(%arg0: i32) -> (i32, i32, i32, i32) {
    %c0_i32 = arith.constant 0 : i32
    %c0_i32_0 = arith.constant 0 : i32
    %c0_i32_1 = arith.constant 0 : i32
    %c0_i32_2 = arith.constant 0 : i32
    return %arg0, %c0_i32, %c0_i32_0, %c0_i32_1 : i32, i32, i32, i32
  }
  func.func @transform_3(%arg0: i32) -> (i32, i32) {
    %c0_i32 = arith.constant 0 : i32
    %c0_i32_0 = arith.constant 0 : i32
    %c0_i32_1 = arith.constant 0 : i32
    return %c0_i32, %c0_i32_0 : i32, i32
  }
  func.func @transform_4(%arg0: i32) -> (i32, i32) {
    %c0_i32 = arith.constant 0 : i32
    %c0_i32_0 = arith.constant 0 : i32
    %c0_i32_1 = arith.constant 0 : i32
    return %c0_i32, %c0_i32_0 : i32, i32
  }
  func.func @transform_5(%arg0: i32) -> (i32, i32, i32, i32) {
    %c0_i32 = arith.constant 0 : i32
    %c0_i32_0 = arith.constant 0 : i32
    %c0_i32_1 = arith.constant 0 : i32
    %c0_i32_2 = arith.constant 0 : i32
    return %arg0, %c0_i32, %c0_i32_0, %c0_i32_1 : i32, i32, i32, i32
  }
}

</mosaic_0001>

<llo_original>
// kernel: _lambda_.5
$region0: #{_lambda_.5}
  #allocation0 [shape = 'u32[]', space=smem, size = 0x4, offset = 0x4, fixed_abs, tag = 'smem constant byte address 0x4 - core index']
  #allocation1 [shape = 'u32[72,128]{1,0:T(1,128)}', space=vmem, size = 0x9000, scoped, tag = 'internal scratch']
  %s0 = inlined_call_operand.vmem [shape: bf16[2,8,8,32], index: 0, kind: input, shape index: {}]
  %s1 = inlined_call_operand.vmem [shape: bf16[2,8,8,32], index: 1, kind: input, shape index: {}]
  %s2 = inlined_call_operand.vmem [shape: f32[2,1,1,32], index: 2, kind: input, shape index: {}]
  %s3 = inlined_call_operand.vmem [shape: f32[2,32], index: 3, kind: input, shape index: {}]
  %s4 = inlined_call_operand.vmem [shape: f32[2,32], index: 4, kind: input, shape index: {}]
  %s5 = inlined_call_operand.hbm [shape: f32[2,8,8,32], index: 5, kind: output, shape index: {}]
  %s6 = sld [smem:[#allocation0]]
  $region53: #{_lambda_.5} parent=0
    _
  %s8 = ssub.s32 1, %s6
  %s9 = scalar_select 0, %s8, %s6
  $region1: #{_lambda_.5} parent=0
    #allocation2 [shape = 'u8[65536]{0}', space=vmem, size = 0x10000, scoped, tag = 'output window, operand 0']
    #allocation3 [shape = 's32[2]{0}', space=sflag, size = 0x8, scoped, tag = 'scoped memory for _lambda_.5']
    %10 = vsyncpa [#allocation3], 0
    %s11 = scalar_lea.sflag [#allocation3], 1
    %12 = vsyncpa %s11, 0
    loop: start=0, step=1, limit=4
    $region2: #{_lambda_.5} parent=1 // loop_pre_header
      _
    $region3: #{_lambda_.5} parent=1 // loop_header
      %s14 = sphi 0, %s18
      %p15 = scmp.ge.s32.totalorder %s14, 4
      %s24 = sphi 0, %s26
      %s27 = sphi 0, %s24
      %s28 = sphi 0, %s27
      %s44 = sphi 0, %s28
      %s50 = sphi 0, %s52
      %s53 = sphi 0, %s50
      %s54 = sphi 0, %s53
      %s70 = sphi 0, %s54
      %s76 = sphi 0, %s78
      %s79 = sphi 0, %s76
      %s80 = sphi 0, %s79
      %s96 = sphi 0, %s80
      %s100 = sphi 0, %s100
      %s102 = sphi 0, %s100
      %s103 = sphi 0, %s102
      %s117 = sphi 0, %s103
      %s121 = sphi 0, %s121
      %s123 = sphi 0, %s121
      %s124 = sphi 0, %s123
      %s138 = sphi 0, %s124
      %s144 = sphi 0, %s146
      %s147 = sphi 0, %s144
      %s148 = sphi 0, %s147
      %s164 = sphi 0, %s148
    $region4: #{_lambda_.5} parent=1 // loop_header_branch
      %17 = sbr.rel (%p15) target = $region8
    $region5: #{_lambda_.5} parent=1 // loop_body
      %s19 = ssub.s32 %s14, 1
      %s20 = ssub.s32 %s14, 2
      %s21 = sadd.s32 %s14, 1
      %s22 = ssub.s32 %s14, %s21
      %p23 = scmp.eq.s32.totalorder %s22, 0
      %s25 = sadd.s32 %s24, 1
      %s26 = scalar_select %p23, %s24, %s25
      %p29 = pneg %p23
      %p30 = scmp.eq.s32.totalorder %s14, 1
      %p31 = por %p29, %p30
      %p32 = scmp.ne.s32.totalorder %s24, %s27
      %p33 = scmp.eq.s32.totalorder %s14, 0
      %p34 = por %p32, %p33
      %p35 = scmp.ne.s32.totalorder %s24, %s27
      %p36 = scmp.eq.s32.totalorder %s19, 1
      %p37 = por %p35, %p36
      %p38 = scmp.ne.s32.totalorder %s27, %s28
      %p39 = scmp.eq.s32.totalorder %s19, 0
      %p40 = por %p38, %p39
      %p41 = scmp.ne.s32.totalorder %s27, %s28
      %p42 = scmp.eq.s32.totalorder %s20, 1
      %p43 = por %p41, %p42
      %p45 = scmp.ne.s32.totalorder %s28, %s44
      %p46 = scmp.eq.s32.totalorder %s20, 0
      %p47 = por %p45, %p46
      %s48 = ssub.s32 %s14, %s21
      %p49 = scmp.eq.s32.totalorder %s48, 0
      %s51 = sadd.s32 %s50, 1
      %s52 = scalar_select %p49, %s50, %s51
      %p55 = pneg %p49
      %p56 = scmp.eq.s32.totalorder %s14, 1
      %p57 = por %p55, %p56
      %p58 = scmp.ne.s32.totalorder %s50, %s53
      %p59 = scmp.eq.s32.totalorder %s14, 0
      %p60 = por %p58, %p59
      %p61 = scmp.ne.s32.totalorder %s50, %s53
      %p62 = scmp.eq.s32.totalorder %s19, 1
      %p63 = por %p61, %p62
      %p64 = scmp.ne.s32.totalorder %s53, %s54
      %p65 = scmp.eq.s32.totalorder %s19, 0
      %p66 = por %p64, %p65
      %p67 = scmp.ne.s32.totalorder %s53, %s54
      %p68 = scmp.eq.s32.totalorder %s20, 1
      %p69 = por %p67, %p68
      %p71 = scmp.ne.s32.totalorder %s54, %s70
      %p72 = scmp.eq.s32.totalorder %s20, 0
      %p73 = por %p71, %p72
      %s74 = ssub.s32 %s14, %s21
      %p75 = scmp.eq.s32.totalorder %s74, 0
      %s77 = sadd.s32 %s76, 1
      %s78 = scalar_select %p75, %s76, %s77
      %p81 = pneg %p75
      %p82 = scmp.eq.s32.totalorder %s14, 1
      %p83 = por %p81, %p82
      %p84 = scmp.ne.s32.totalorder %s76, %s79
      %p85 = scmp.eq.s32.totalorder %s14, 0
      %p86 = por %p84, %p85
      %p87 = scmp.ne.s32.totalorder %s76, %s79
      %p88 = scmp.eq.s32.totalorder %s19, 1
      %p89 = por %p87, %p88
      %p90 = scmp.ne.s32.totalorder %s79, %s80
      %p91 = scmp.eq.s32.totalorder %s19, 0
      %p92 = por %p90, %p91
      %p93 = scmp.ne.s32.totalorder %s79, %s80
      %p94 = scmp.eq.s32.totalorder %s20, 1
      %p95 = por %p93, %p94
      %p97 = scmp.ne.s32.totalorder %s80, %s96
      %p98 = scmp.eq.s32.totalorder %s20, 0
      %p99 = por %p97, %p98
      %s101 = sadd.s32 %s100, 1
      %p104 = scmp.eq.s32.totalorder %s14, 1
      %p105 = scmp.ne.s32.totalorder %s100, %s102
      %p106 = scmp.eq.s32.totalorder %s14, 0
      %p107 = por %p105, %p106
      %p108 = scmp.ne.s32.totalorder %s100, %s102
      %p109 = scmp.eq.s32.totalorder %s19, 1
      %p110 = por %p108, %p109
      %p111 = scmp.ne.s32.totalorder %s102, %s103
      %p112 = scmp.eq.s32.totalorder %s19, 0
      %p113 = por %p111, %p112
      %p114 = scmp.ne.s32.totalorder %s102, %s103
      %p115 = scmp.eq.s32.totalorder %s20, 1
      %p116 = por %p114, %p115
      %p118 = scmp.ne.s32.totalorder %s103, %s117
      %p119 = scmp.eq.s32.totalorder %s20, 0
      %p120 = por %p118, %p119
      %s122 = sadd.s32 %s121, 1
      %p125 = scmp.eq.s32.totalorder %s14, 1
      %p126 = scmp.ne.s32.totalorder %s121, %s123
      %p127 = scmp.eq.s32.totalorder %s14, 0
      %p128 = por %p126, %p127
      %p129 = scmp.ne.s32.totalorder %s121, %s123
      %p130 = scmp.eq.s32.totalorder %s19, 1
      %p131 = por %p129, %p130
      %p132 = scmp.ne.s32.totalorder %s123, %s124
      %p133 = scmp.eq.s32.totalorder %s19, 0
      %p134 = por %p132, %p133
      %p135 = scmp.ne.s32.totalorder %s123, %s124
      %p136 = scmp.eq.s32.totalorder %s20, 1
      %p137 = por %p135, %p136
      %p139 = scmp.ne.s32.totalorder %s124, %s138
      %p140 = scmp.eq.s32.totalorder %s20, 0
      %p141 = por %p139, %p140
      %s142 = ssub.s32 %s14, %s21
      %p143 = scmp.eq.s32.totalorder %s142, 0
      %s145 = sadd.s32 %s144, 1
      %s146 = scalar_select %p143, %s144, %s145
      %p149 = pneg %p143
      %p150 = scmp.eq.s32.totalorder %s14, 1
      %p151 = por %p149, %p150
      %p152 = scmp.ne.s32.totalorder %s144, %s147
      %p153 = scmp.eq.s32.totalorder %s14, 0
      %p154 = por %p152, %p153
      %p155 = scmp.ne.s32.totalorder %s144, %s147
      %p156 = scmp.eq.s32.totalorder %s19, 1
      %p157 = por %p155, %p156
      %p158 = scmp.ne.s32.totalorder %s147, %s148
      %p159 = scmp.eq.s32.totalorder %s19, 0
      %p160 = por %p158, %p159
      %p161 = scmp.ne.s32.totalorder %s147, %s148
      %p162 = scmp.eq.s32.totalorder %s20, 1
      %p163 = por %p161, %p162
      %p165 = scmp.ne.s32.totalorder %s148, %s164
      %p166 = scmp.eq.s32.totalorder %s20, 0
      %p167 = por %p165, %p166
      %p168 = scmp.le.s32.totalorder 1, %s14
      %p169 = scmp.lt.s32.totalorder %s14, 3
      %p170 = pnand %p168, %p169
      %p171 = pneg %p170
      // Predicated region
      $region9: #{_lambda_.5} parent=5 // pred_check
        _
      $region10: #{_lambda_.5} parent=5 // pred_check_branch
        %173 = sbr.rel (%p170) target = $region12
      $region11: #{_lambda_.5} parent=5 // pred_region
        %s174 = ssub.s32 %s14, 1
        // Predicated region
        $region13: #{_lambda_.5} parent=11 // pred_check
          %p175 = pneg %p113
        $region14: #{_lambda_.5} parent=11 // pred_check_branch
          %177 = sbr.rel (%p175) target = $region16
        $region15: #{_lambda_.5} parent=11 // pred_region
          _
        $region16: #{_lambda_.5} parent=11 // pred_fallthru
          _
        // Predicated region
        $region17: #{_lambda_.5} parent=11 // pred_check
          %p178 = pneg %p134
        $region18: #{_lambda_.5} parent=11 // pred_check_branch
          %180 = sbr.rel (%p178) target = $region20
        $region19: #{_lambda_.5} parent=11 // pred_region
          _
        $region20: #{_lambda_.5} parent=11 // pred_fallthru
          _
      $region12: #{_lambda_.5} parent=5 // pred_fallthru
        _
      %p181 = scmp.lt.s32.totalorder %s14, 2
      // Predicated region
      $region21: #{_lambda_.5} parent=5 // pred_check
        %p182 = pneg %p181
      $region22: #{_lambda_.5} parent=5 // pred_check_branch
        %184 = sbr.rel (%p182) target = $region24
      $region23: #{_lambda_.5} parent=5 // pred_region
        // Predicated region
        $region25: #{_lambda_.5} parent=23 // pred_check
          %p185 = pneg %p34
        $region26: #{_lambda_.5} parent=23 // pred_check_branch
          %187 = sbr.rel (%p185) target = $region28
        $region27: #{_lambda_.5} parent=23 // pred_region
          %p188 = scmp.lt.s32.totalorder %s14, 1
          %s189 = scalar_select %p188, %s14, 1
          %s190 = smul.addr %s189, 8
          %s191 = smul.addr %s190, 4
          %s192 = scalar_lea.vmem %s0, %s191
        $region28: #{_lambda_.5} parent=23 // pred_fallthru
          _
        // Predicated region
        $region29: #{_lambda_.5} parent=23 // pred_check
          %p193 = pneg %p60
        $region30: #{_lambda_.5} parent=23 // pred_check_branch
          %195 = sbr.rel (%p193) target = $region32
        $region31: #{_lambda_.5} parent=23 // pred_region
          %p196 = scmp.lt.s32.totalorder %s14, 1
          %s197 = scalar_select %p196, %s14, 1
          %s198 = smul.addr %s197, 8
          %s199 = smul.addr %s198, 4
          %s200 = scalar_lea.vmem %s1, %s199
        $region32: #{_lambda_.5} parent=23 // pred_fallthru
          _
        // Predicated region
        $region33: #{_lambda_.5} parent=23 // pred_check
          %p201 = pneg %p86
        $region34: #{_lambda_.5} parent=23 // pred_check_branch
          %203 = sbr.rel (%p201) target = $region36
        $region35: #{_lambda_.5} parent=23 // pred_region
          %p204 = scmp.lt.s32.totalorder %s14, 1
          %s205 = scalar_select %p204, %s14, 1
          %s206 = scalar_lea.vmem %s2, %s205
        $region36: #{_lambda_.5} parent=23 // pred_fallthru
          _
      $region24: #{_lambda_.5} parent=5 // pred_fallthru
        _
      %p207 = scmp.le.s32.totalorder 1, %s14
      %p208 = scmp.lt.s32.totalorder %s14, 3
      %p209 = pnand %p207, %p208
      %p210 = pneg %p209
      // Predicated region
      $region37: #{_lambda_.5} parent=5 // pred_check
        _
      $region38: #{_lambda_.5} parent=5 // pred_check_branch
        %212 = sbr.rel (%p209) target = $region40
      $region39: #{_lambda_.5} parent=5 // pred_region
        %s213 = ssub.s32 %s14, 1
        %p214 = scmp.lt.s32.totalorder %s19, 1
        %s215 = scalar_select %p214, %s19, 1
        %s216 = smul.addr %s215, 8
        %s217 = smul.addr %s216, 4
        %s218 = scalar_lea.vmem %s0, %s217
        %p219 = pneg %p40
        %p220 = pneg %p37
        %p221 = scmp.lt.s32.totalorder %s19, 1
        %s222 = scalar_select %p221, %s19, 1
        %s223 = smul.addr %s222, 8
        %s224 = smul.addr %s223, 4
        %s225 = scalar_lea.vmem %s1, %s224
        %p226 = pneg %p66
        %p227 = pneg %p63
        %p228 = scmp.lt.s32.totalorder %s19, 1
        %s229 = scalar_select %p228, %s19, 1
        %s230 = scalar_lea.vmem %s2, %s229
        %p231 = pneg %p92
        %p232 = pneg %p89
        %p233 = pneg %p113
        %p234 = pneg %p110
        %p235 = pneg %p134
        %p236 = pneg %p131
        %p237 = pneg %p160
        %p238 = pneg %p157
        %s239 = sand.u32 %s147, 1
        %s240 = scalar_lea.sflag [#allocation3], %s239
        %s241 = sand.u32 %s147, 1
        %s242 = smul.addr %s241, 64
        %s243 = scalar_lea.vmem [#allocation2], %s242
        %p244 = scmp.lt.s32.totalorder %s19, 1
        %s245 = scalar_select %p244, %s19, 1
        %s246 = smul.addr %s245, 8
        %s247 = smul.addr %s246, 4
        %s248 = scalar_lea.vmem %s0, %s247
        %p249 = scmp.lt.s32.totalorder %s19, 1
        %s250 = scalar_select %p249, %s19, 1
        %s251 = smul.addr %s250, 8
        %s252 = smul.addr %s251, 4
        %s253 = scalar_lea.vmem %s1, %s252
        %p254 = scmp.lt.s32.totalorder %s19, 1
        %s255 = scalar_select %p254, %s19, 1
        %s256 = scalar_lea.vmem %s2, %s255
        %v257 = vld [vmem:[%s248] sm:$0xf]
        %v258 = vld [vmem:[%s248 + $0x4] sm:$0xf]
        %v259 = vld [vmem:[%s248 + $0x8] sm:$0xf]
        %v260 = vld [vmem:[%s248 + $0xc] sm:$0xf]
        %v261 = vld [vmem:[%s248 + $0x10] sm:$0xf]
        %v262 = vld [vmem:[%s248 + $0x14] sm:$0xf]
        %v263 = vld [vmem:[%s248 + $0x18] sm:$0xf]
        %v264 = vld [vmem:[%s248 + $0x1c] sm:$0xf]
        %v265 = vunpack.c.l.bf16 %v257
        %v266 = vunpack.c.l.bf16 %v258
        %v267 = vunpack.c.l.bf16 %v259
        %v268 = vunpack.c.l.bf16 %v260
        %v269 = vunpack.c.l.bf16 %v261
        %v270 = vunpack.c.l.bf16 %v262
        %v271 = vunpack.c.l.bf16 %v263
        %v272 = vunpack.c.l.bf16 %v264
        %v273 = vld [vmem:[%s3] sm:$0x1]
        %v274 = vperm.slane %v273, 0
        %v275 = vmul.f32 %v265, %v274
        %v276 = vmul.f32 %v266, %v274
        %v277 = vmul.f32 %v267, %v274
        %v278 = vmul.f32 %v268, %v274
        %v279 = vmul.f32 %v269, %v274
        %v280 = vmul.f32 %v270, %v274
        %v281 = vmul.f32 %v271, %v274
        %v282 = vmul.f32 %v272, %v274
        %v283 = vld [vmem:[%s3 + $0x1] sm:$0x1]
        %v284 = vperm.slane %v283, 0
        %v285 = vadd.f32 %v275, %v284
        %v286 = vadd.f32 %v276, %v284
        %v287 = vadd.f32 %v277, %v284
        %v288 = vadd.f32 %v278, %v284
        %v289 = vadd.f32 %v279, %v284
        %v290 = vadd.f32 %v280, %v284
        %v291 = vadd.f32 %v281, %v284
        %v292 = vadd.f32 %v282, %v284
        %v293 = vld [vmem:[%s253] sm:$0xf]
        %v294 = vld [vmem:[%s253 + $0x4] sm:$0xf]
        %v295 = vld [vmem:[%s253 + $0x8] sm:$0xf]
        %v296 = vld [vmem:[%s253 + $0xc] sm:$0xf]
        %v297 = vld [vmem:[%s253 + $0x10] sm:$0xf]
        %v298 = vld [vmem:[%s253 + $0x14] sm:$0xf]
        %v299 = vld [vmem:[%s253 + $0x18] sm:$0xf]
        %v300 = vld [vmem:[%s253 + $0x1c] sm:$0xf]
        %v301 = vunpack.c.l.bf16 %v293
        %v302 = vunpack.c.l.bf16 %v294
        %v303 = vunpack.c.l.bf16 %v295
        %v304 = vunpack.c.l.bf16 %v296
        %v305 = vunpack.c.l.bf16 %v297
        %v306 = vunpack.c.l.bf16 %v298
        %v307 = vunpack.c.l.bf16 %v299
        %v308 = vunpack.c.l.bf16 %v300
        %v309 = vld [vmem:[%s4] sm:$0x1]
        %v310 = vperm.slane %v309, 0
        %v311 = vmul.f32 %v301, %v310
        %v312 = vmul.f32 %v302, %v310
        %v313 = vmul.f32 %v303, %v310
        %v314 = vmul.f32 %v304, %v310
        %v315 = vmul.f32 %v305, %v310
        %v316 = vmul.f32 %v306, %v310
        %v317 = vmul.f32 %v307, %v310
        %v318 = vmul.f32 %v308, %v310
        %v319 = vld [vmem:[%s4 + $0x1] sm:$0x1]
        %v320 = vperm.slane %v319, 0
        %v321 = vadd.f32 %v311, %v320
        %v322 = vadd.f32 %v312, %v320
        %v323 = vadd.f32 %v313, %v320
        %v324 = vadd.f32 %v314, %v320
        %v325 = vadd.f32 %v315, %v320
        %v326 = vadd.f32 %v316, %v320
        %v327 = vadd.f32 %v317, %v320
        %v328 = vadd.f32 %v318, %v320
        %v329 = vld [vmem:[%s256] sm:$0x1]
        %v331 = vperm.slane %v329, 0
        %v333 = vmul.f32 %v285, %v331
        %v334 = vmul.f32 %v286, %v331
        %v335 = vmul.f32 %v287, %v331
        %v336 = vmul.f32 %v288, %v331
        %v337 = vmul.f32 %v289, %v331
        %v338 = vmul.f32 %v290, %v331
        %v339 = vmul.f32 %v291, %v331
        %v340 = vmul.f32 %v292, %v331
        %v341 = vadd.f32 %v333, %v321
        %v342 = vadd.f32 %v334, %v322
        %v343 = vadd.f32 %v335, %v323
        %v344 = vadd.f32 %v336, %v324
        %v345 = vadd.f32 %v337, %v325
        %v346 = vadd.f32 %v338, %v326
        %v347 = vadd.f32 %v339, %v327
        %v348 = vadd.f32 %v340, %v328
        %v349 = vmax.f32 %v341, 0.0
        %v350 = vmax.f32 %v342, 0.0
        %v351 = vmax.f32 %v343, 0.0
        %v352 = vmax.f32 %v344, 0.0
        %v353 = vmax.f32 %v345, 0.0
        %v354 = vmax.f32 %v346, 0.0
        %v355 = vmax.f32 %v347, 0.0
        %v356 = vmax.f32 %v348, 0.0
        %vm357 = vcmask 261120
        %358 = vst.msk [vmem:[%s243] sm:$0xff] %vm357, %v349
        %359 = vst.msk [vmem:[%s243 + $0x8] sm:$0xff] %vm357, %v350
        %360 = vst.msk [vmem:[%s243 + $0x10] sm:$0xff] %vm357, %v351
        %361 = vst.msk [vmem:[%s243 + $0x18] sm:$0xff] %vm357, %v352
        %362 = vst.msk [vmem:[%s243 + $0x20] sm:$0xff] %vm357, %v353
        %363 = vst.msk [vmem:[%s243 + $0x28] sm:$0xff] %vm357, %v354
        %364 = vst.msk [vmem:[%s243 + $0x30] sm:$0xff] %vm357, %v355
        %365 = vst.msk [vmem:[%s243 + $0x38] sm:$0xff] %vm357, %v356
        %s366 = sand.u32 %s147, 1
        %s367 = scalar_lea.sflag [#allocation3], %s366
        %s368 = sand.u32 %s147, 1
        %s369 = smul.addr %s368, 64
        %s370 = scalar_lea.vmem [#allocation2], %s369
        // Predicated region
        $region41: #{_lambda_.5} parent=39 // pred_check
          %p371 = pneg %p157
        $region42: #{_lambda_.5} parent=39 // pred_check_branch
          %373 = sbr.rel (%p371) target = $region44
        $region43: #{_lambda_.5} parent=39 // pred_region
          %375 = vsyncadd %s367, 0
          %s376 = smul.addr %s19, 8
          %s377 = smul.addr %s376, 8
          %s378 = scalar_lea.hbm %s5, %s377
          %s379 = sshll.u32 %s370, 4
          %s380 = int_to_ptr.vmem [resolvable:$true] %s379
          %s381 = sshll.u32 %s378, 4
          %s382 = int_to_ptr.hbm [resolvable:$true] %s381
          %387 = dma.vmem_to_hbm [thread:$0]  %s380, 1024, %s382, %s367, 128, 128, 8
        $region44: #{_lambda_.5} parent=39 // pred_fallthru
          _
      $region40: #{_lambda_.5} parent=5 // pred_fallthru
        _
      %p388 = scmp.le.s32.totalorder 2, %s14
      // Predicated region
      $region45: #{_lambda_.5} parent=5 // pred_check
        %p389 = pneg %p388
      $region46: #{_lambda_.5} parent=5 // pred_check_branch
        %391 = sbr.rel (%p389) target = $region48
      $region47: #{_lambda_.5} parent=5 // pred_region
        %s392 = ssub.s32 %s14, 2
        // Predicated region
        $region49: #{_lambda_.5} parent=47 // pred_check
          %p393 = pneg %p163
        $region50: #{_lambda_.5} parent=47 // pred_check_branch
          %395 = sbr.rel (%p393) target = $region52
        $region51: #{_lambda_.5} parent=47 // pred_region
          %s396 = sand.u32 %s148, 1
          %s397 = scalar_lea.sflag [#allocation3], %s396
          %s398 = sand.u32 %s148, 1
          %s399 = smul.addr %s398, 64
          %s400 = scalar_lea.vmem [#allocation2], %s399
          %402 = dma.done %s397, 1024
        $region52: #{_lambda_.5} parent=47 // pred_fallthru
          _
      $region48: #{_lambda_.5} parent=5 // pred_fallthru
        _
    $region6: #{_lambda_.5} parent=1 // loop_footer
      %s18 = sadd.s32 1, %s14
    $region7: #{_lambda_.5} parent=1 // loop_footer_branch
      %13 = sbr.rel target = $region3
    $region8: #{_lambda_.5} parent=1 // loop_exit
      _
    %403 = vsyncpa [#allocation3], 1
    %s404 = scalar_lea.sflag [#allocation3], 1
    %405 = vsyncpa %s404, 1

// kernel: _lambda_.4
$region0: #{_lambda_.4}
  #allocation0 [shape = 'u32[]', space=smem, size = 0x4, offset = 0x4, fixed_abs, tag = 'smem constant byte address 0x4 - core index']
  #allocation1 [shape = 'u32[72,128]{1,0:T(1,128)}', space=vmem, size = 0x9000, scoped, tag = 'internal scratch']
  %s0 = inlined_call_operand.vmem [shape: bf16[2,8,8,32], index: 0, kind: input, shape index: {}]
  %s1 = inlined_call_operand.vmem [shape: f32[2,32], index: 1, kind: input, shape index: {}]
  %s2 = inlined_call_operand.vmem [shape: bf16[288,32], index: 2, kind: input, shape index: {}]
  %s3 = inlined_call_operand.vmem [shape: bf16[2,8,8,32], index: 3, kind: output, shape index: {0}]
  %s4 = inlined_call_operand.vmem [shape: f32[2,2,32], index: 4, kind: output, shape index: {1}]
  %5 = xla_tuple %s3, %s4
  %s6 = sld [smem:[#allocation0]]
  $region53: #{_lambda_.4} parent=0
    _
  %s8 = ssub.s32 1, %s6
  %s9 = scalar_select 0, %s8, %s6
  loop: start=0, step=1, limit=4
  $region2: #{_lambda_.4} parent=0 // loop_pre_header
    _
  $region3: #{_lambda_.4} parent=0 // loop_header
    %s11 = sphi 0, %s15
    %p12 = scmp.ge.s32.totalorder %s11, 4
    %s21 = sphi 0, %s23
    %s24 = sphi 0, %s21
    %s25 = sphi 0, %s24
    %s41 = sphi 0, %s25
    %s45 = sphi 0, %s45
    %s47 = sphi 0, %s45
    %s48 = sphi 0, %s47
    %s62 = sphi 0, %s48
    %s66 = sphi 0, %s66
    %s68 = sphi 0, %s66
    %s69 = sphi 0, %s68
    %s83 = sphi 0, %s69
    %s89 = sphi 0, %s91
    %s92 = sphi 0, %s89
    %s93 = sphi 0, %s92
    %s109 = sphi 0, %s93
    %s115 = sphi 0, %s117
    %s118 = sphi 0, %s115
    %s119 = sphi 0, %s118
    %s135 = sphi 0, %s119
  $region4: #{_lambda_.4} parent=0 // loop_header_branch
    %14 = sbr.rel (%p12) target = $region8
  $region5: #{_lambda_.4} parent=0 // loop_body
    %s16 = ssub.s32 %s11, 1
    %s17 = ssub.s32 %s11, 2
    %s18 = sadd.s32 %s11, 1
    %s19 = ssub.s32 %s11, %s18
    %p20 = scmp.eq.s32.totalorder %s19, 0
    %s22 = sadd.s32 %s21, 1
    %s23 = scalar_select %p20, %s21, %s22
    %p26 = pneg %p20
    %p27 = scmp.eq.s32.totalorder %s11, 1
    %p28 = por %p26, %p27
    %p29 = scmp.ne.s32.totalorder %s21, %s24
    %p30 = scmp.eq.s32.totalorder %s11, 0
    %p31 = por %p29, %p30
    %p32 = scmp.ne.s32.totalorder %s21, %s24
    %p33 = scmp.eq.s32.totalorder %s16, 1
    %p34 = por %p32, %p33
    %p35 = scmp.ne.s32.totalorder %s24, %s25
    %p36 = scmp.eq.s32.totalorder %s16, 0
    %p37 = por %p35, %p36
    %p38 = scmp.ne.s32.totalorder %s24, %s25
    %p39 = scmp.eq.s32.totalorder %s17, 1
    %p40 = por %p38, %p39
    %p42 = scmp.ne.s32.totalorder %s25, %s41
    %p43 = scmp.eq.s32.totalorder %s17, 0
    %p44 = por %p42, %p43
    %s46 = sadd.s32 %s45, 1
    %p49 = scmp.eq.s32.totalorder %s11, 1
    %p50 = scmp.ne.s32.totalorder %s45, %s47
    %p51 = scmp.eq.s32.totalorder %s11, 0
    %p52 = por %p50, %p51
    %p53 = scmp.ne.s32.totalorder %s45, %s47
    %p54 = scmp.eq.s32.totalorder %s16, 1
    %p55 = por %p53, %p54
    %p56 = scmp.ne.s32.totalorder %s47, %s48
    %p57 = scmp.eq.s32.totalorder %s16, 0
    %p58 = por %p56, %p57
    %p59 = scmp.ne.s32.totalorder %s47, %s48
    %p60 = scmp.eq.s32.totalorder %s17, 1
    %p61 = por %p59, %p60
    %p63 = scmp.ne.s32.totalorder %s48, %s62
    %p64 = scmp.eq.s32.totalorder %s17, 0
    %p65 = por %p63, %p64
    %s67 = sadd.s32 %s66, 1
    %p70 = scmp.eq.s32.totalorder %s11, 1
    %p71 = scmp.ne.s32.totalorder %s66, %s68
    %p72 = scmp.eq.s32.totalorder %s11, 0
    %p73 = por %p71, %p72
    %p74 = scmp.ne.s32.totalorder %s66, %s68
    %p75 = scmp.eq.s32.totalorder %s16, 1
    %p76 = por %p74, %p75
    %p77 = scmp.ne.s32.totalorder %s68, %s69
    %p78 = scmp.eq.s32.totalorder %s16, 0
    %p79 = por %p77, %p78
    %p80 = scmp.ne.s32.totalorder %s68, %s69
    %p81 = scmp.eq.s32.totalorder %s17, 1
    %p82 = por %p80, %p81
    %p84 = scmp.ne.s32.totalorder %s69, %s83
    %p85 = scmp.eq.s32.totalorder %s17, 0
    %p86 = por %p84, %p85
    %s87 = ssub.s32 %s11, %s18
    %p88 = scmp.eq.s32.totalorder %s87, 0
    %s90 = sadd.s32 %s89, 1
    %s91 = scalar_select %p88, %s89, %s90
    %p94 = pneg %p88
    %p95 = scmp.eq.s32.totalorder %s11, 1
    %p96 = por %p94, %p95
    %p97 = scmp.ne.s32.totalorder %s89, %s92
    %p98 = scmp.eq.s32.totalorder %s11, 0
    %p99 = por %p97, %p98
    %p100 = scmp.ne.s32.totalorder %s89, %s92
    %p101 = scmp.eq.s32.totalorder %s16, 1
    %p102 = por %p100, %p101
    %p103 = scmp.ne.s32.totalorder %s92, %s93
    %p104 = scmp.eq.s32.totalorder %s16, 0
    %p105 = por %p103, %p104
    %p106 = scmp.ne.s32.totalorder %s92, %s93
    %p107 = scmp.eq.s32.totalorder %s17, 1
    %p108 = por %p106, %p107
    %p110 = scmp.ne.s32.totalorder %s93, %s109
    %p111 = scmp.eq.s32.totalorder %s17, 0
    %p112 = por %p110, %p111
    %s113 = ssub.s32 %s11, %s18
    %p114 = scmp.eq.s32.totalorder %s113, 0
    %s116 = sadd.s32 %s115, 1
    %s117 = scalar_select %p114, %s115, %s116
    %p120 = pneg %p114
    %p121 = scmp.eq.s32.totalorder %s11, 1
    %p122 = por %p120, %p121
    %p123 = scmp.ne.s32.totalorder %s115, %s118
    %p124 = scmp.eq.s32.totalorder %s11, 0
    %p125 = por %p123, %p124
    %p126 = scmp.ne.s32.totalorder %s115, %s118
    %p127 = scmp.eq.s32.totalorder %s16, 1
    %p128 = por %p126, %p127
    %p129 = scmp.ne.s32.totalorder %s118, %s119
    %p130 = scmp.eq.s32.totalorder %s16, 0
    %p131 = por %p129, %p130
    %p132 = scmp.ne.s32.totalorder %s118, %s119
    %p133 = scmp.eq.s32.totalorder %s17, 1
    %p134 = por %p132, %p133
    %p136 = scmp.ne.s32.totalorder %s119, %s135
    %p137 = scmp.eq.s32.totalorder %s17, 0
    %p138 = por %p136, %p137
    %p139 = scmp.le.s32.totalorder 1, %s11
    %p140 = scmp.lt.s32.totalorder %s11, 3
    %p141 = pnand %p139, %p140
    %p142 = pneg %p141
    // Predicated region
    $region9: #{_lambda_.4} parent=5 // pred_check
      _
    $region10: #{_lambda_.4} parent=5 // pred_check_branch
      %144 = sbr.rel (%p141) target = $region12
    $region11: #{_lambda_.4} parent=5 // pred_region
      %s145 = ssub.s32 %s11, 1
      // Predicated region
      $region13: #{_lambda_.4} parent=11 // pred_check
        %p146 = pneg %p58
      $region14: #{_lambda_.4} parent=11 // pred_check_branch
        %148 = sbr.rel (%p146) target = $region16
      $region15: #{_lambda_.4} parent=11 // pred_region
        _
      $region16: #{_lambda_.4} parent=11 // pred_fallthru
        _
      // Predicated region
      $region17: #{_lambda_.4} parent=11 // pred_check
        %p149 = pneg %p79
      $region18: #{_lambda_.4} parent=11 // pred_check_branch
        %151 = sbr.rel (%p149) target = $region20
      $region19: #{_lambda_.4} parent=11 // pred_region
        _
      $region20: #{_lambda_.4} parent=11 // pred_fallthru
        _
    $region12: #{_lambda_.4} parent=5 // pred_fallthru
      _
    %p152 = scmp.lt.s32.totalorder %s11, 2
    // Predicated region
    $region21: #{_lambda_.4} parent=5 // pred_check
      %p153 = pneg %p152
    $region22: #{_lambda_.4} parent=5 // pred_check_branch
      %155 = sbr.rel (%p153) target = $region24
    $region23: #{_lambda_.4} parent=5 // pred_region
      // Predicated region
      $region25: #{_lambda_.4} parent=23 // pred_check
        %p156 = pneg %p31
      $region26: #{_lambda_.4} parent=23 // pred_check_branch
        %158 = sbr.rel (%p156) target = $region28
      $region27: #{_lambda_.4} parent=23 // pred_region
        %p159 = scmp.lt.s32.totalorder %s11, 1
        %s160 = scalar_select %p159, %s11, 1
        %s161 = smul.addr %s160, 8
        %s162 = smul.addr %s161, 4
        %s163 = scalar_lea.vmem %s0, %s162
      $region28: #{_lambda_.4} parent=23 // pred_fallthru
        _
    $region24: #{_lambda_.4} parent=5 // pred_fallthru
      _
    %p164 = scmp.le.s32.totalorder 1, %s11
    %p165 = scmp.lt.s32.totalorder %s11, 3
    %p166 = pnand %p164, %p165
    %p167 = pneg %p166
    // Predicated region
    $region29: #{_lambda_.4} parent=5 // pred_check
      _
    $region30: #{_lambda_.4} parent=5 // pred_check_branch
      %169 = sbr.rel (%p166) target = $region32
    $region31: #{_lambda_.4} parent=5 // pred_region
      %s170 = ssub.s32 %s11, 1
      %p171 = scmp.lt.s32.totalorder %s16, 1
      %s172 = scalar_select %p171, %s16, 1
      %s173 = smul.addr %s172, 8
      %s174 = smul.addr %s173, 4
      %s175 = scalar_lea.vmem %s0, %s174
      %p176 = pneg %p37
      %p177 = pneg %p34
      %p178 = pneg %p58
      %p179 = pneg %p55
      %p180 = pneg %p79
      %p181 = pneg %p76
      %p182 = pneg %p105
      %p183 = pneg %p102
      %p184 = scmp.lt.s32.totalorder %s16, 1
      %s185 = scalar_select %p184, %s16, 1
      %s186 = smul.addr %s185, 8
      %s187 = smul.addr %s186, 4
      %s188 = scalar_lea.vmem %s3, %s187
      %p189 = pneg %p131
      %p190 = pneg %p128
      %p191 = scmp.lt.s32.totalorder %s16, 1
      %s192 = scalar_select %p191, %s16, 1
      %s193 = smul.addr %s192, 2
      %s194 = scalar_lea.vmem %s4, %s193
      %p195 = scmp.lt.s32.totalorder %s16, 1
      %s196 = scalar_select %p195, %s16, 1
      %s197 = smul.addr %s196, 8
      %s198 = smul.addr %s197, 4
      %s199 = scalar_lea.vmem %s0, %s198
      %p200 = scmp.lt.s32.totalorder %s16, 1
      %s201 = scalar_select %p200, %s16, 1
      %s202 = smul.addr %s201, 8
      %s203 = smul.addr %s202, 4
      %s204 = scalar_lea.vmem %s3, %s203
      %p205 = scmp.lt.s32.totalorder %s16, 1
      %s206 = scalar_select %p205, %s16, 1
      %s207 = smul.addr %s206, 2
      %s208 = scalar_lea.vmem %s4, %s207
      %v210 = vld [vmem:[%s199] sm:$0xf]
      %v211 = vld [vmem:[%s199 + $0x4] sm:$0xf]
      %v212 = vld [vmem:[%s199 + $0x8] sm:$0xf]
      %v213 = vld [vmem:[%s199 + $0xc] sm:$0xf]
      %v214 = vld [vmem:[%s199 + $0x10] sm:$0xf]
      %v215 = vld [vmem:[%s199 + $0x14] sm:$0xf]
      %v216 = vld [vmem:[%s199 + $0x18] sm:$0xf]
      %v217 = vld [vmem:[%s199 + $0x1c] sm:$0xf]
      %v218 = vunpack.c.l.bf16 %v210
      %v219 = vunpack.c.l.bf16 %v211
      %v220 = vunpack.c.l.bf16 %v212
      %v221 = vunpack.c.l.bf16 %v213
      %v222 = vunpack.c.l.bf16 %v214
      %v223 = vunpack.c.l.bf16 %v215
      %v224 = vunpack.c.l.bf16 %v216
      %v225 = vunpack.c.l.bf16 %v217
      %v226 = vld [vmem:[%s1] sm:$0x1]
      %v227 = vperm.slane %v226, 0
      %v228 = vmul.f32 %v218, %v227
      %v229 = vmul.f32 %v219, %v227
      %v230 = vmul.f32 %v220, %v227
      %v231 = vmul.f32 %v221, %v227
      %v232 = vmul.f32 %v222, %v227
      %v233 = vmul.f32 %v223, %v227
      %v234 = vmul.f32 %v224, %v227
      %v235 = vmul.f32 %v225, %v227
      %v236 = vld [vmem:[%s1 + $0x1] sm:$0x1]
      %v237 = vperm.slane %v236, 0
      %v238 = vadd.f32 %v228, %v237
      %v239 = vadd.f32 %v229, %v237
      %v240 = vadd.f32 %v230, %v237
      %v241 = vadd.f32 %v231, %v237
      %v242 = vadd.f32 %v232, %v237
      %v243 = vadd.f32 %v233, %v237
      %v244 = vadd.f32 %v234, %v237
      %v245 = vadd.f32 %v235, %v237
      %v246 = vmax.f32 %v238, 0.0
      %v247 = vmax.f32 %v239, 0.0
      %v248 = vmax.f32 %v240, 0.0
      %v249 = vmax.f32 %v241, 0.0
      %v250 = vmax.f32 %v242, 0.0
      %v251 = vmax.f32 %v243, 0.0
      %v252 = vmax.f32 %v244, 0.0
      %v253 = vmax.f32 %v245, 0.0
      %v254 = vpack.c.bf16 %v246, %v246
      %v255 = vpack.c.bf16 %v247, %v247
      %v256 = vpack.c.bf16 %v248, %v248
      %v257 = vpack.c.bf16 %v249, %v249
      %v258 = vpack.c.bf16 %v250, %v250
      %v259 = vpack.c.bf16 %v251, %v251
      %v260 = vpack.c.bf16 %v252, %v252
      %v261 = vpack.c.bf16 %v253, %v253
      %v263 = vshrl.u32 0, 16
      %v265 = vrot.slane %v263, 7
      %v266 = vshll.u32 0, 16
      %v268 = vor.u32 %v265, %v266
      %v270 = vshrl.u32 %v254, 16
      %v272 = vrot.slane %v270, 7
      %v273 = vshll.u32 %v254, 16
      %v275 = vor.u32 %v272, %v273
      %v277 = vshrl.u32 %v255, 16
      %v279 = vrot.slane %v277, 7
      %v280 = vshll.u32 %v255, 16
      %v282 = vor.u32 %v279, %v280
      %v284 = vshrl.u32 %v256, 16
      %v286 = vrot.slane %v284, 7
      %v287 = vshll.u32 %v256, 16
      %v289 = vor.u32 %v286, %v287
      %v291 = vshrl.u32 %v257, 16
      %v293 = vrot.slane %v291, 7
      %v294 = vshll.u32 %v257, 16
      %v296 = vor.u32 %v293, %v294
      %v298 = vshrl.u32 %v258, 16
      %v300 = vrot.slane %v298, 7
      %v301 = vshll.u32 %v258, 16
      %v303 = vor.u32 %v300, %v301
      %v305 = vshrl.u32 %v259, 16
      %v307 = vrot.slane %v305, 7
      %v308 = vshll.u32 %v259, 16
      %v310 = vor.u32 %v307, %v308
      %v312 = vshrl.u32 %v260, 16
      %v314 = vrot.slane %v312, 7
      %v315 = vshll.u32 %v260, 16
      %v317 = vor.u32 %v314, %v315
      %v319 = vshrl.u32 %v261, 16
      %v321 = vrot.slane %v319, 7
      %v322 = vshll.u32 %v261, 16
      %v324 = vor.u32 %v321, %v322
      %vm334 = vcmask 1040384
      %vm335 = vsmask.f32 256
      %vm336 = vmand %vm334, %vm335
      %v337 = vsel %vm336, 0, %v268
      %v338 = vsel %vm336, 0, %v275
      %v339 = vsel %vm336, 0, %v282
      %v340 = vsel %vm336, 0, %v289
      %v341 = vsel %vm336, 0, %v296
      %v342 = vsel %vm336, 0, %v303
      %v343 = vsel %vm336, 0, %v310
      %v344 = vsel %vm336, 0, %v317
      %v345 = vsel %vm336, 0, %v324
      %vm346 = vcmask 1044480
      %vm347 = vsmask.f32 4352
      %vm348 = vmand %vm346, %vm347
      %v349 = vsel %vm348, %v337, 0
      %v350 = vsel %vm348, %v338, 0
      %v351 = vsel %vm348, %v339, 0
      %v352 = vsel %vm348, %v340, 0
      %v353 = vsel %vm348, %v341, 0
      %v354 = vsel %vm348, %v342, 0
      %v355 = vsel %vm348, %v343, 0
      %v356 = vsel %vm348, %v344, 0
      %v357 = vsel %vm348, %v345, 0
      %v366 = vunpack.c.l.b16 %v349
      %v367 = vunpack.c.h.b16 %v349
      %v368 = vunpack.c.l.b16 %v350
      %v369 = vunpack.c.h.b16 %v350
      %v370 = vunpack.c.l.b16 %v351
      %v371 = vunpack.c.h.b16 %v351
      %v372 = vunpack.c.l.b16 %v352
      %v373 = vunpack.c.h.b16 %v352
      %v374 = vunpack.c.l.b16 %v353
      %v375 = vunpack.c.h.b16 %v353
      %v376 = vunpack.c.l.b16 %v354
      %v377 = vunpack.c.h.b16 %v354
      %v378 = vunpack.c.l.b16 %v355
      %v379 = vunpack.c.h.b16 %v355
      %v380 = vunpack.c.l.b16 %v356
      %v381 = vunpack.c.h.b16 %v356
      %v382 = vpack.c.b16 %v366, %v366
      %v383 = vpack.c.b16 %v367, %v367
      %v384 = vpack.c.b16 %v368, %v368
      %v385 = vpack.c.b16 %v369, %v369
      %v386 = vpack.c.b16 %v370, %v370
      %v387 = vpack.c.b16 %v371, %v371
      %v388 = vpack.c.b16 %v372, %v372
      %v389 = vpack.c.b16 %v373, %v373
      %v390 = vpack.c.b16 %v374, %v374
      %v391 = vpack.c.b16 %v375, %v375
      %v392 = vpack.c.b16 %v376, %v376
      %v393 = vpack.c.b16 %v377, %v377
      %v394 = vpack.c.b16 %v378, %v378
      %v395 = vpack.c.b16 %v379, %v379
      %v396 = vpack.c.b16 %v380, %v380
      %v397 = vpack.c.b16 %v381, %v381
      %vm398 = vsmask.f32 3328
      %vm399 = vsmask.f32 7440
      %vm400 = vmor %vm398, %vm399
      %v402 = vshrl.u32 %v382, 16
      %v404 = vrot.slane %v402, 4
      %v405 = vshll.u32 %v382, 16
      %v407 = vrot.slane %v405, 5
      %v408 = vor.u32 %v404, %v407
      %v409 = vrot.slane %v408, 4
      %v411 = vshll.u32 %v383, 16
      %v413 = vrot.slane %v411, 5
      %v414 = vsel %vm400, %v409, %v413
      %v416 = vshrl.u32 %v384, 16
      %v418 = vrot.slane %v416, 4
      %v419 = vshll.u32 %v384, 16
      %v421 = vrot.slane %v419, 5
      %v422 = vor.u32 %v418, %v421
      %v423 = vrot.slane %v422, 4
      %v425 = vshll.u32 %v385, 16
      %v427 = vrot.slane %v425, 5
      %v428 = vsel %vm400, %v423, %v427
      %v430 = vshrl.u32 %v386, 16
      %v432 = vrot.slane %v430, 4
      %v433 = vshll.u32 %v386, 16
      %v435 = vrot.slane %v433, 5
      %v436 = vor.u32 %v432, %v435
      %v437 = vrot.slane %v436, 4
      %v439 = vshll.u32 %v387, 16
      %v441 = vrot.slane %v439, 5
      %v442 = vsel %vm400, %v437, %v441
      %v444 = vshrl.u32 %v388, 16
      %v446 = vrot.slane %v444, 4
      %v447 = vshll.u32 %v388, 16
      %v449 = vrot.slane %v447, 5
      %v450 = vor.u32 %v446, %v449
      %v451 = vrot.slane %v450, 4
      %v453 = vshll.u32 %v389, 16
      %v455 = vrot.slane %v453, 5
      %v456 = vsel %vm400, %v451, %v455
      %v458 = vshrl.u32 %v390, 16
      %v460 = vrot.slane %v458, 4
      %v461 = vshll.u32 %v390, 16
      %v463 = vrot.slane %v461, 5
      %v464 = vor.u32 %v460, %v463
      %v465 = vrot.slane %v464, 4
      %v467 = vshll.u32 %v391, 16
      %v469 = vrot.slane %v467, 5
      %v470 = vsel %vm400, %v465, %v469
      %v472 = vshrl.u32 %v392, 16
      %v474 = vrot.slane %v472, 4
      %v475 = vshll.u32 %v392, 16
      %v477 = vrot.slane %v475, 5
      %v478 = vor.u32 %v474, %v477
      %v479 = vrot.slane %v478, 4
      %v481 = vshll.u32 %v393, 16
      %v483 = vrot.slane %v481, 5
      %v484 = vsel %vm400, %v479, %v483
      %v486 = vshrl.u32 %v394, 16
      %v488 = vrot.slane %v486, 4
      %v489 = vshll.u32 %v394, 16
      %v491 = vrot.slane %v489, 5
      %v492 = vor.u32 %v488, %v491
      %v493 = vrot.slane %v492, 4
      %v495 = vshll.u32 %v395, 16
      %v497 = vrot.slane %v495, 5
      %v498 = vsel %vm400, %v493, %v497
      %v500 = vshrl.u32 %v396, 16
      %v502 = vrot.slane %v500, 4
      %v503 = vshll.u32 %v396, 16
      %v505 = vrot.slane %v503, 5
      %v506 = vor.u32 %v502, %v505
      %v507 = vrot.slane %v506, 4
      %v509 = vshll.u32 %v397, 16
      %v511 = vrot.slane %v509, 5
      %v512 = vsel %vm400, %v507, %v511
      %vm513 = vcmask 1042432
      %vm514 = vcmask 1046532
      %vm515 = vmor %vm513, %vm514
      %v516 = vrot.slane %v382, 5
      %v517 = vrot.slane %v516, 4
      %v518 = vrot.slane %v383, 5
      %v519 = vsel %vm515, %v517, %v518
      %v520 = vrot.slane %v384, 5
      %v521 = vrot.slane %v520, 4
      %v522 = vrot.slane %v385, 5
      %v523 = vsel %vm515, %v521, %v522
      %v524 = vrot.slane %v386, 5
      %v525 = vrot.slane %v524, 4
      %v526 = vrot.slane %v387, 5
      %v527 = vsel %vm515, %v525, %v526
      %v528 = vrot.slane %v388, 5
      %v529 = vrot.slane %v528, 4
      %v530 = vrot.slane %v389, 5
      %v531 = vsel %vm515, %v529, %v530
      %v532 = vrot.slane %v390, 5
      %v533 = vrot.slane %v532, 4
      %v534 = vrot.slane %v391, 5
      %v535 = vsel %vm515, %v533, %v534
      %v536 = vrot.slane %v392, 5
      %v537 = vrot.slane %v536, 4
      %v538 = vrot.slane %v393, 5
      %v539 = vsel %vm515, %v537, %v538
      %v540 = vrot.slane %v394, 5
      %v541 = vrot.slane %v540, 4
      %v542 = vrot.slane %v395, 5
      %v543 = vsel %vm515, %v541, %v542
      %v544 = vrot.slane %v396, 5
      %v545 = vrot.slane %v544, 4
      %v546 = vrot.slane %v397, 5
      %v547 = vsel %vm515, %v545, %v546
      %v549 = vunpack.c.l.b16 %v357
      %v550 = vunpack.c.h.b16 %v357
      %v551 = vpack.c.b16 %v549, %v549
      %v552 = vpack.c.b16 %v550, %v550
      %v554 = vshrl.u32 %v551, 16
      %v556 = vrot.slane %v554, 4
      %v557 = vshll.u32 %v551, 16
      %v559 = vrot.slane %v557, 5
      %v560 = vor.u32 %v556, %v559
      %v561 = vrot.slane %v560, 4
      %v563 = vshll.u32 %v552, 16
      %v565 = vrot.slane %v563, 5
      %v566 = vsel %vm400, %v561, %v565
      %v567 = vrot.slane %v551, 5
      %v568 = vrot.slane %v567, 4
      %v569 = vrot.slane %v552, 5
      %v570 = vsel %vm515, %v568, %v569
      %v571 = vpack.c.b16 %v368, %v366
      %v572 = vpack.c.b16 %v372, %v370
      %v573 = vpack.c.b16 %v376, %v374
      %v574 = vpack.c.b16 %v380, %v378
      %v575 = vunpack.c.l.b16 %v414
      %v576 = vunpack.c.l.b16 %v428
      %v577 = vunpack.c.l.b16 %v442
      %v578 = vunpack.c.l.b16 %v456
      %v579 = vunpack.c.l.b16 %v470
      %v580 = vunpack.c.l.b16 %v484
      %v581 = vunpack.c.l.b16 %v498
      %v582 = vunpack.c.l.b16 %v512
      %v583 = vpack.c.b16 %v576, %v575
      %v584 = vpack.c.b16 %v578, %v577
      %v585 = vpack.c.b16 %v580, %v579
      %v586 = vpack.c.b16 %v582, %v581
      %587 = vrot.lane.b32.xlu0 %v583, 32
      %v588 = vpop.permute.xlu0 %587
      %589 = vrot.lane.b32.xlu0 %v584, 32
      %v590 = vpop.permute.xlu0 %589
      %591 = vrot.lane.b32.xlu0 %v585, 32
      %v592 = vpop.permute.xlu0 %591
      %593 = vrot.lane.b32.xlu0 %v586, 32
      %v594 = vpop.permute.xlu0 %593
      %v595 = vunpack.c.l.b16 %v519
      %v596 = vunpack.c.l.b16 %v523
      %v597 = vunpack.c.l.b16 %v527
      %v598 = vunpack.c.l.b16 %v531
      %v599 = vunpack.c.l.b16 %v535
      %v600 = vunpack.c.l.b16 %v539
      %v601 = vunpack.c.l.b16 %v543
      %v602 = vunpack.c.l.b16 %v547
      %v603 = vpack.c.b16 %v596, %v595
      %v604 = vpack.c.b16 %v598, %v597
      %v605 = vpack.c.b16 %v600, %v599
      %v606 = vpack.c.b16 %v602, %v601
      %607 = vrot.lane.b32.xlu0 %v603, 64
      %v608 = vpop.permute.xlu0 %607
      %609 = vrot.lane.b32.xlu0 %v604, 64
      %v610 = vpop.permute.xlu0 %609
      %611 = vrot.lane.b32.xlu0 %v605, 64
      %v612 = vpop.permute.xlu0 %611
      %613 = vrot.lane.b32.xlu0 %v606, 64
      %v614 = vpop.permute.xlu0 %613
      %v615 = vpack.c.b16 %v370, %v368
      %v616 = vpack.c.b16 %v374, %v372
      %v617 = vpack.c.b16 %v378, %v376
      %v618 = vpack.c.b16 %v549, %v380
      %619 = vrot.lane.b32.xlu0 %v615, 96
      %v620 = vpop.permute.xlu0 %619
      %621 = vrot.lane.b32.xlu0 %v616, 96
      %v622 = vpop.permute.xlu0 %621
      %623 = vrot.lane.b32.xlu0 %v617, 96
      %v624 = vpop.permute.xlu0 %623
      %625 = vrot.lane.b32.xlu0 %v618, 96
      %v626 = vpop.permute.xlu0 %625
      %v627 = vunpack.c.l.b16 %v566
      %v628 = vpack.c.b16 %v577, %v576
      %v629 = vpack.c.b16 %v579, %v578
      %v630 = vpack.c.b16 %v581, %v580
      %v631 = vpack.c.b16 %v627, %v582
      %v632 = vunpack.c.l.b16 %v570
      %v633 = vpack.c.b16 %v597, %v596
      %v634 = vpack.c.b16 %v599, %v598
      %v635 = vpack.c.b16 %v601, %v600
      %v636 = vpack.c.b16 %v632, %v602
      %637 = vrot.lane.b32.xlu0 %v633, 32
      %v638 = vpop.permute.xlu0 %637
      %639 = vrot.lane.b32.xlu0 %v634, 32
      %v640 = vpop.permute.xlu0 %639
      %641 = vrot.lane.b32.xlu0 %v635, 32
      %v642 = vpop.permute.xlu0 %641
      %643 = vrot.lane.b32.xlu0 %v636, 32
      %v644 = vpop.permute.xlu0 %643
      %v645 = vpack.c.b16 %v366, %v549
      %646 = vrot.lane.b32.xlu0 %v572, 64
      %v647 = vpop.permute.xlu0 %646
      %648 = vrot.lane.b32.xlu0 %v573, 64
      %v649 = vpop.permute.xlu0 %648
      %650 = vrot.lane.b32.xlu0 %v574, 64
      %v651 = vpop.permute.xlu0 %650
      %652 = vrot.lane.b32.xlu0 %v645, 64
      %v653 = vpop.permute.xlu0 %652
      %v654 = vpack.c.b16 %v575, %v627
      %655 = vrot.lane.b32.xlu0 %v584, 96
      %v656 = vpop.permute.xlu0 %655
      %657 = vrot.lane.b32.xlu0 %v585, 96
      %v658 = vpop.permute.xlu0 %657
      %659 = vrot.lane.b32.xlu0 %v586, 96
      %v660 = vpop.permute.xlu0 %659
      %661 = vrot.lane.b32.xlu0 %v654, 96
      %v662 = vpop.permute.xlu0 %661
      %v663 = vpack.c.b16 %v595, %v632
      %vm664 = vcmask 261120
      %v667 = vsel %vm664, %v571, %v588
      %v670 = vsel %vm664, %v572, %v590
      %v673 = vsel %vm664, %v573, %v592
      %v676 = vsel %vm664, %v574, %v594
      %vm677 = vcmask 523264
      %v679 = vsel %vm677, %v667, %v608
      %v681 = vsel %vm677, %v670, %v610
      %v683 = vsel %vm677, %v673, %v612
      %v685 = vsel %vm677, %v676, %v614
      %vm686 = vcmask 785408
      %v688 = vsel %vm686, %v679, %v620
      %v691 = vsel %vm686, %v681, %v622
      %v694 = vsel %vm686, %v683, %v624
      %v697 = vsel %vm686, %v685, %v626
      %v701 = vsel %vm664, %v628, %v638
      %v704 = vsel %vm664, %v629, %v640
      %v707 = vsel %vm664, %v630, %v642
      %v710 = vsel %vm664, %v631, %v644
      %v712 = vsel %vm677, %v701, %v647
      %v714 = vsel %vm677, %v704, %v649
      %v716 = vsel %vm677, %v707, %v651
      %v718 = vsel %vm677, %v710, %v653
      %v720 = vsel %vm686, %v712, %v656
      %v723 = vsel %vm686, %v714, %v658
      %v726 = vsel %vm686, %v716, %v660
      %v729 = vsel %vm686, %v718, %v662
      %v731 = vld [vmem:[%s2] sm:$0xf]
      %v732 = vld [vmem:[%s2 + $0x4] sm:$0xf]
      %v733 = vld [vmem:[%s2 + $0x8] sm:$0xf]
      %v734 = vld [vmem:[%s2 + $0xc] sm:$0xf]
      %v735 = vld [vmem:[%s2 + $0x10] sm:$0xf]
      %v736 = vld [vmem:[%s2 + $0x14] sm:$0xf]
      %v737 = vld [vmem:[%s2 + $0x18] sm:$0xf]
      %v738 = vld [vmem:[%s2 + $0x1c] sm:$0xf]
      %v739 = vld [vmem:[%s2 + $0x20] sm:$0xf]
      %v740 = vld [vmem:[%s2 + $0x24] sm:$0xf]
      %v741 = vld [vmem:[%s2 + $0x28] sm:$0xf]
      %v742 = vld [vmem:[%s2 + $0x2c] sm:$0xf]
      %v743 = vld [vmem:[%s2 + $0x30] sm:$0xf]
      %v744 = vld [vmem:[%s2 + $0x34] sm:$0xf]
      %v745 = vld [vmem:[%s2 + $0x38] sm:$0xf]
      %v746 = vld [vmem:[%s2 + $0x3c] sm:$0xf]
      %v747 = vld [vmem:[%s2 + $0x40] sm:$0xf]
      %v748 = vld [vmem:[%s2 + $0x44] sm:$0xf]
      %v749 = vld [vmem:[%s2 + $0x48] sm:$0xf]
      %v750 = vld [vmem:[%s2 + $0x4c] sm:$0xf]
      %v751 = vld [vmem:[%s2 + $0x50] sm:$0xf]
      %v752 = vld [vmem:[%s2 + $0x54] sm:$0xf]
      %v753 = vld [vmem:[%s2 + $0x58] sm:$0xf]
      %v754 = vld [vmem:[%s2 + $0x5c] sm:$0xf]
      %v755 = vld [vmem:[%s2 + $0x60] sm:$0xf]
      %v756 = vld [vmem:[%s2 + $0x64] sm:$0xf]
      %v757 = vld [vmem:[%s2 + $0x68] sm:$0xf]
      %v758 = vld [vmem:[%s2 + $0x6c] sm:$0xf]
      %v759 = vld [vmem:[%s2 + $0x70] sm:$0xf]
      %v760 = vld [vmem:[%s2 + $0x74] sm:$0xf]
      %v761 = vld [vmem:[%s2 + $0x78] sm:$0xf]
      %v762 = vld [vmem:[%s2 + $0x7c] sm:$0xf]
      %v763 = vld [vmem:[%s2 + $0x80] sm:$0xf]
      %v764 = vld [vmem:[%s2 + $0x84] sm:$0xf]
      %v765 = vld [vmem:[%s2 + $0x88] sm:$0xf]
      %v766 = vld [vmem:[%s2 + $0x8c] sm:$0xf]
      %v803 = vunpack.c.l.b16 %v731
      %v804 = vunpack.c.l.b16 %v732
      %v805 = vunpack.c.l.b16 %v733
      %v806 = vunpack.c.l.b16 %v734
      %v807 = vunpack.c.l.b16 %v735
      %v808 = vunpack.c.l.b16 %v736
      %v809 = vunpack.c.l.b16 %v737
      %v810 = vunpack.c.l.b16 %v738
      %v811 = vunpack.c.l.b16 %v739
      %v812 = vunpack.c.l.b16 %v740
      %v813 = vunpack.c.l.b16 %v741
      %v814 = vunpack.c.l.b16 %v742
      %v815 = vunpack.c.l.b16 %v743
      %v816 = vunpack.c.l.b16 %v744
      %v817 = vunpack.c.l.b16 %v745
      %v818 = vunpack.c.l.b16 %v746
      %v819 = vunpack.c.l.b16 %v747
      %v820 = vunpack.c.l.b16 %v748
      %v821 = vunpack.c.l.b16 %v749
      %v822 = vunpack.c.l.b16 %v750
      %v823 = vunpack.c.l.b16 %v751
      %v824 = vunpack.c.l.b16 %v752
      %v825 = vunpack.c.l.b16 %v753
      %v826 = vunpack.c.l.b16 %v754
      %v827 = vunpack.c.l.b16 %v755
      %v828 = vunpack.c.l.b16 %v756
      %v829 = vunpack.c.l.b16 %v757
      %v830 = vunpack.c.l.b16 %v758
      %v831 = vunpack.c.l.b16 %v759
      %v832 = vunpack.c.l.b16 %v760
      %v833 = vunpack.c.l.b16 %v761
      %v834 = vunpack.c.l.b16 %v762
      %v835 = vunpack.c.l.b16 %v763
      %v836 = vunpack.c.l.b16 %v764
      %v837 = vunpack.c.l.b16 %v765
      %v838 = vunpack.c.l.b16 %v766
      %v839 = vpack.c.b16 %v804, %v803
      %v840 = vpack.c.b16 %v806, %v805
      %v841 = vpack.c.b16 %v808, %v807
      %v842 = vpack.c.b16 %v810, %v809
      %v843 = vpack.c.b16 %v812, %v811
      %v844 = vpack.c.b16 %v814, %v813
      %v845 = vpack.c.b16 %v816, %v815
      %v846 = vpack.c.b16 %v818, %v817
      %v847 = vpack.c.b16 %v820, %v819
      %v848 = vpack.c.b16 %v822, %v821
      %v849 = vpack.c.b16 %v824, %v823
      %v850 = vpack.c.b16 %v826, %v825
      %v851 = vpack.c.b16 %v828, %v827
      %v852 = vpack.c.b16 %v830, %v829
      %v853 = vpack.c.b16 %v832, %v831
      %v854 = vpack.c.b16 %v834, %v833
      %v855 = vpack.c.b16 %v836, %v835
      %v856 = vpack.c.b16 %v838, %v837
      %v876 = vsel %vm664, %v604, 0
      %v879 = vsel %vm664, %v605, 0
      %v882 = vsel %vm664, %v606, 0
      %v885 = vsel %vm664, %v663, 0
      %887 = vmatpush.bf16.msra.mxu0 %v846
      %888 = vmatpush.bf16.msra.mxu0 %v845
      %889 = vmatpush.bf16.msra.mxu0 %v844
      %890 = vmatpush.bf16.msra.mxu0 %v843
      %891 = vmatpush.bf16.msra.mxu0 %v842
      %892 = vmatpush.bf16.msra.mxu0 %v841
      %893 = vmatpush.bf16.msra.mxu0 %v840
      %894 = vmatpush.bf16.msra.mxu0 %v839
      %895 = vmatmul.bf16.gmra.mxu0 %v688
      %v896 = vpop.f32.mrf.mxu0
      %v897 = vadd.f32 0.0, %v896
      %v898 = vpop.f32.mrf.mxu0
      %v899 = vadd.f32 0.0, %v898
      %900 = vmatmul.bf16.gmra.mxu0 %v691
      %v901 = vpop.f32.mrf.mxu0
      %v902 = vadd.f32 0.0, %v901
      %v903 = vpop.f32.mrf.mxu0
      %v904 = vadd.f32 0.0, %v903
      %905 = vmatmul.bf16.gmra.mxu0 %v694
      %v906 = vpop.f32.mrf.mxu0
      %v907 = vadd.f32 0.0, %v906
      %v908 = vpop.f32.mrf.mxu0
      %v909 = vadd.f32 0.0, %v908
      %910 = vmatmul.bf16.gmra.mxu0 %v697
      %v911 = vpop.f32.mrf.mxu0
      %v912 = vadd.f32 0.0, %v911
      %v913 = vpop.f32.mrf.mxu0
      %v914 = vadd.f32 0.0, %v913
      %915 = vdwg.mxu0
      %916 = vmatpush.bf16.msra.mxu0 %v854
      %917 = vmatpush.bf16.msra.mxu0 %v853
      %918 = vmatpush.bf16.msra.mxu0 %v852
      %919 = vmatpush.bf16.msra.mxu0 %v851
      %920 = vmatpush.bf16.msra.mxu0 %v850
      %921 = vmatpush.bf16.msra.mxu0 %v849
      %922 = vmatpush.bf16.msra.mxu0 %v848
      %923 = vmatpush.bf16.msra.mxu0 %v847
      %924 = vmatmul.bf16.gmra.mxu0 %v720
      %v925 = vpop.f32.mrf.mxu0
      %v926 = vadd.f32 %v897, %v925
      %v927 = vpop.f32.mrf.mxu0
      %v928 = vadd.f32 %v899, %v927
      %929 = vmatmul.bf16.gmra.mxu0 %v723
      %v930 = vpop.f32.mrf.mxu0
      %v931 = vadd.f32 %v902, %v930
      %v932 = vpop.f32.mrf.mxu0
      %v933 = vadd.f32 %v904, %v932
      %934 = vmatmul.bf16.gmra.mxu0 %v726
      %v935 = vpop.f32.mrf.mxu0
      %v936 = vadd.f32 %v907, %v935
      %v937 = vpop.f32.mrf.mxu0
      %v938 = vadd.f32 %v909, %v937
      %939 = vmatmul.bf16.gmra.mxu0 %v729
      %v940 = vpop.f32.mrf.mxu0
      %v941 = vadd.f32 %v912, %v940
      %v942 = vpop.f32.mrf.mxu0
      %v943 = vadd.f32 %v914, %v942
      %944 = vdwg.mxu0
      %945 = vmatpush.bf16.msra.mxu0 0
      %946 = vmatpush.bf16.msra.mxu0 0
      %947 = vmatpush.bf16.msra.mxu0 0
      %948 = vmatpush.bf16.msra.mxu0 0
      %949 = vmatpush.bf16.msra.mxu0 0
      %950 = vmatpush.bf16.msra.mxu0 0
      %951 = vmatpush.bf16.msra.mxu0 %v856
      %952 = vmatpush.bf16.msra.mxu0 %v855
      %953 = vmatmul.bf16.gmra.mxu0 %v876
      %v954 = vpop.f32.mrf.mxu0
      %v955 = vadd.f32 %v926, %v954
      %v956 = vpop.f32.mrf.mxu0
      %v957 = vadd.f32 %v928, %v956
      %958 = vmatmul.bf16.gmra.mxu0 %v879
      %v959 = vpop.f32.mrf.mxu0
      %v960 = vadd.f32 %v931, %v959
      %v961 = vpop.f32.mrf.mxu0
      %v962 = vadd.f32 %v933, %v961
      %963 = vmatmul.bf16.gmra.mxu0 %v882
      %v964 = vpop.f32.mrf.mxu0
      %v965 = vadd.f32 %v936, %v964
      %v966 = vpop.f32.mrf.mxu0
      %v967 = vadd.f32 %v938, %v966
      %968 = vmatmul.bf16.gmra.mxu0 %v885
      %v969 = vpop.f32.mrf.mxu0
      %v970 = vadd.f32 %v941, %v969
      %v971 = vpop.f32.mrf.mxu0
      %v972 = vadd.f32 %v943, %v971
      %973 = vdwg.mxu0
      %v974 = vpack.c.bf16 %v955, %v955
      %v975 = vpack.c.bf16 %v957, %v957
      %v976 = vpack.c.bf16 %v960, %v960
      %v977 = vpack.c.bf16 %v962, %v962
      %v978 = vpack.c.bf16 %v965, %v965
      %v979 = vpack.c.bf16 %v967, %v967
      %v980 = vpack.c.bf16 %v970, %v970
      %v981 = vpack.c.bf16 %v972, %v972
      %vm982 = vcmask 257024
      %983 = vst.msk [vmem:[%s204] sm:$0xf] %vm982, %v974
      %984 = vst.msk [vmem:[%s204 + $0x4] sm:$0xf] %vm982, %v975
      %985 = vst.msk [vmem:[%s204 + $0x8] sm:$0xf] %vm982, %v976
      %986 = vst.msk [vmem:[%s204 + $0xc] sm:$0xf] %vm982, %v977
      %987 = vst.msk [vmem:[%s204 + $0x10] sm:$0xf] %vm982, %v978
      %988 = vst.msk [vmem:[%s204 + $0x14] sm:$0xf] %vm982, %v979
      %989 = vst.msk [vmem:[%s204 + $0x18] sm:$0xf] %vm982, %v980
      %990 = vst.msk [vmem:[%s204 + $0x1c] sm:$0xf] %vm982, %v981
      %v991 = vsel %vm664, %v955, 0.0
      %v992 = vsel %vm664, %v957, 0.0
      %v993 = vadd.f32 %v991, %v992
      %v994 = vsel %vm664, %v960, 0.0
      %v995 = vadd.f32 %v993, %v994
      %v996 = vsel %vm664, %v962, 0.0
      %v997 = vadd.f32 %v995, %v996
      %v998 = vsel %vm664, %v965, 0.0
      %v999 = vadd.f32 %v997, %v998
      %v1000 = vsel %vm664, %v967, 0.0
      %v1001 = vadd.f32 %v999, %v1000
      %v1002 = vsel %vm664, %v970, 0.0
      %v1003 = vadd.f32 %v1001, %v1002
      %v1004 = vsel %vm664, %v972, 0.0
      %v1005 = vadd.f32 %v1003, %v1004
      %v1006 = vrot.slane %v1005, 4
      %v1007 = vadd.f32 %v1005, %v1006
      %v1008 = vrot.slane %v1007, 2
      %v1009 = vadd.f32 %v1007, %v1008
      %v1010 = vrot.slane %v1009, 1
      %v1011 = vadd.f32 %v1009, %v1010
      %v1012 = vmul.f32 %v955, %v955
      %v1013 = vmul.f32 %v957, %v957
      %v1014 = vmul.f32 %v960, %v960
      %v1015 = vmul.f32 %v962, %v962
      %v1016 = vmul.f32 %v965, %v965
      %v1017 = vmul.f32 %v967, %v967
      %v1018 = vmul.f32 %v970, %v970
      %v1019 = vmul.f32 %v972, %v972
      %v1020 = vsel %vm664, %v1012, 0.0
      %v1021 = vsel %vm664, %v1013, 0.0
      %v1022 = vadd.f32 %v1020, %v1021
      %v1023 = vsel %vm664, %v1014, 0.0
      %v1024 = vadd.f32 %v1022, %v1023
      %v1025 = vsel %vm664, %v1015, 0.0
      %v1026 = vadd.f32 %v1024, %v1025
      %v1027 = vsel %vm664, %v1016, 0.0
      %v1028 = vadd.f32 %v1026, %v1027
      %v1029 = vsel %vm664, %v1017, 0.0
      %v1030 = vadd.f32 %v1028, %v1029
      %v1031 = vsel %vm664, %v1018, 0.0
      %v1032 = vadd.f32 %v1030, %v1031
      %v1033 = vsel %vm664, %v1019, 0.0
      %v1034 = vadd.f32 %v1032, %v1033
      %v1035 = vrot.slane %v1034, 4
      %v1036 = vadd.f32 %v1034, %v1035
      %v1037 = vrot.slane %v1036, 2
      %v1038 = vadd.f32 %v1036, %v1037
      %v1039 = vrot.slane %v1038, 1
      %v1040 = vadd.f32 %v1038, %v1039
      %vm1041 = vcmask 1040384
      %v1042 = vsel %vm1041, %v1011, %v1040
      %vm1043 = vcmask 254976
      %1044 = vst.msk [vmem:[%s208] sm:$0x3] %vm1043, %v1042
      %p1045 = scmp.lt.s32.totalorder %s16, 1
      %s1046 = scalar_select %p1045, %s16, 1
      %s1047 = smul.addr %s1046, 8
      %s1048 = smul.addr %s1047, 4
      %s1049 = scalar_lea.vmem %s3, %s1048
      %p1050 = scmp.lt.s32.totalorder %s16, 1
      %s1051 = scalar_select %p1050, %s16, 1
      %s1052 = smul.addr %s1051, 2
      %s1053 = scalar_lea.vmem %s4, %s1052
      // Predicated region
      $region33: #{_lambda_.4} parent=31 // pred_check
        %p1054 = pneg %p102
      $region34: #{_lambda_.4} parent=31 // pred_check_branch
        %1056 = sbr.rel (%p1054) target = $region36
      $region35: #{_lambda_.4} parent=31 // pred_region
        _
      $region36: #{_lambda_.4} parent=31 // pred_fallthru
        _
      // Predicated region
      $region37: #{_lambda_.4} parent=31 // pred_check
        %p1057 = pneg %p128
      $region38: #{_lambda_.4} parent=31 // pred_check_branch
        %1059 = sbr.rel (%p1057) target = $region40
      $region39: #{_lambda_.4} parent=31 // pred_region
        _
      $region40: #{_lambda_.4} parent=31 // pred_fallthru
        _
    $region32: #{_lambda_.4} parent=5 // pred_fallthru
      _
    %p1060 = scmp.le.s32.totalorder 2, %s11
    // Predicated region
    $region41: #{_lambda_.4} parent=5 // pred_check
      %p1061 = pneg %p1060
    $region42: #{_lambda_.4} parent=5 // pred_check_branch
      %1063 = sbr.rel (%p1061) target = $region44
    $region43: #{_lambda_.4} parent=5 // pred_region
      %s1064 = ssub.s32 %s11, 2
      // Predicated region
      $region45: #{_lambda_.4} parent=43 // pred_check
        %p1065 = pneg %p108
      $region46: #{_lambda_.4} parent=43 // pred_check_branch
        %1067 = sbr.rel (%p1065) target = $region48
      $region47: #{_lambda_.4} parent=43 // pred_region
        %p1068 = scmp.lt.s32.totalorder %s17, 1
        %s1069 = scalar_select %p1068, %s17, 1
        %s1070 = smul.addr %s1069, 8
        %s1071 = smul.addr %s1070, 4
        %s1072 = scalar_lea.vmem %s3, %s1071
      $region48: #{_lambda_.4} parent=43 // pred_fallthru
        _
      // Predicated region
      $region49: #{_lambda_.4} parent=43 // pred_check
        %p1073 = pneg %p134
      $region50: #{_lambda_.4} parent=43 // pred_check_branch
        %1075 = sbr.rel (%p1073) target = $region52
      $region51: #{_lambda_.4} parent=43 // pred_region
        %p1076 = scmp.lt.s32.totalorder %s17, 1
        %s1077 = scalar_select %p1076, %s17, 1
        %s1078 = smul.addr %s1077, 2
        %s1079 = scalar_lea.vmem %s4, %s1078
      $region52: #{_lambda_.4} parent=43 // pred_fallthru
        _
    $region44: #{_lambda_.4} parent=5 // pred_fallthru
      _
  $region6: #{_lambda_.4} parent=0 // loop_footer
    %s15 = sadd.s32 1, %s11
  $region7: #{_lambda_.4} parent=0 // loop_footer_branch
    %10 = sbr.rel target = $region3
  $region8: #{_lambda_.4} parent=0 // loop_exit
    _

// kernel: _lambda_.3
$region0: #{_lambda_.3}
  #allocation0 [shape = 'u32[]', space=smem, size = 0x4, offset = 0x4, fixed_abs, tag = 'smem constant byte address 0x4 - core index']
  #allocation1 [shape = 'u32[72,128]{1,0:T(1,128)}', space=vmem, size = 0x9000, scoped, tag = 'internal scratch']
  %s0 = inlined_call_operand.vmem [shape: bf16[2,9,9,16], index: 0, kind: input, shape index: {}]
  %s1 = inlined_call_operand.vmem [shape: bf16[2,9,9,16], index: 1, kind: input, shape index: {}]
  %s2 = inlined_call_operand.vmem [shape: bf16[2,9,9,16], index: 2, kind: input, shape index: {}]
  %s3 = inlined_call_operand.vmem [shape: bf16[2,9,9,16], index: 3, kind: input, shape index: {}]
  %s4 = inlined_call_operand.vmem [shape: bf16[144,64], index: 4, kind: input, shape index: {}]
  %s5 = inlined_call_operand.vmem [shape: bf16[2,8,8,32], index: 5, kind: output, shape index: {0}]
  %s6 = inlined_call_operand.vmem [shape: bf16[2,8,8,32], index: 6, kind: output, shape index: {1}]
  %s7 = inlined_call_operand.vmem [shape: f32[2,2,64], index: 7, kind: output, shape index: {2}]
  %8 = xla_tuple %s5, %s6, %s7
  %s9 = sld [smem:[#allocation0]]
  $region69: #{_lambda_.3} parent=0
    _
  %s11 = ssub.s32 1, %s9
  %s12 = scalar_select 0, %s11, %s9
  loop: start=0, step=1, limit=4
  $region2: #{_lambda_.3} parent=0 // loop_pre_header
    _
  $region3: #{_lambda_.3} parent=0 // loop_header
    %s14 = sphi 0, %s18
    %p15 = scmp.ge.s32.totalorder %s14, 4
    %s24 = sphi 0, %s26
    %s27 = sphi 0, %s24
    %s28 = sphi 0, %s27
    %s44 = sphi 0, %s28
    %s50 = sphi 0, %s52
    %s53 = sphi 0, %s50
    %s54 = sphi 0, %s53
    %s70 = sphi 0, %s54
    %s76 = sphi 0, %s78
    %s79 = sphi 0, %s76
    %s80 = sphi 0, %s79
    %s96 = sphi 0, %s80
    %s102 = sphi 0, %s104
    %s105 = sphi 0, %s102
    %s106 = sphi 0, %s105
    %s122 = sphi 0, %s106
    %s126 = sphi 0, %s126
    %s128 = sphi 0, %s126
    %s129 = sphi 0, %s128
    %s143 = sphi 0, %s129
    %s149 = sphi 0, %s151
    %s152 = sphi 0, %s149
    %s153 = sphi 0, %s152
    %s169 = sphi 0, %s153
    %s175 = sphi 0, %s177
    %s178 = sphi 0, %s175
    %s179 = sphi 0, %s178
    %s195 = sphi 0, %s179
    %s201 = sphi 0, %s203
    %s204 = sphi 0, %s201
    %s205 = sphi 0, %s204
    %s221 = sphi 0, %s205
  $region4: #{_lambda_.3} parent=0 // loop_header_branch
    %17 = sbr.rel (%p15) target = $region8
  $region5: #{_lambda_.3} parent=0 // loop_body
    %s19 = ssub.s32 %s14, 1
    %s20 = ssub.s32 %s14, 2
    %s21 = sadd.s32 %s14, 1
    %s22 = ssub.s32 %s14, %s21
    %p23 = scmp.eq.s32.totalorder %s22, 0
    %s25 = sadd.s32 %s24, 1
    %s26 = scalar_select %p23, %s24, %s25
    %p29 = pneg %p23
    %p30 = scmp.eq.s32.totalorder %s14, 1
    %p31 = por %p29, %p30
    %p32 = scmp.ne.s32.totalorder %s24, %s27
    %p33 = scmp.eq.s32.totalorder %s14, 0
    %p34 = por %p32, %p33
    %p35 = scmp.ne.s32.totalorder %s24, %s27
    %p36 = scmp.eq.s32.totalorder %s19, 1
    %p37 = por %p35, %p36
    %p38 = scmp.ne.s32.totalorder %s27, %s28
    %p39 = scmp.eq.s32.totalorder %s19, 0
    %p40 = por %p38, %p39
    %p41 = scmp.ne.s32.totalorder %s27, %s28
    %p42 = scmp.eq.s32.totalorder %s20, 1
    %p43 = por %p41, %p42
    %p45 = scmp.ne.s32.totalorder %s28, %s44
    %p46 = scmp.eq.s32.totalorder %s20, 0
    %p47 = por %p45, %p46
    %s48 = ssub.s32 %s14, %s21
    %p49 = scmp.eq.s32.totalorder %s48, 0
    %s51 = sadd.s32 %s50, 1
    %s52 = scalar_select %p49, %s50, %s51
    %p55 = pneg %p49
    %p56 = scmp.eq.s32.totalorder %s14, 1
    %p57 = por %p55, %p56
    %p58 = scmp.ne.s32.totalorder %s50, %s53
    %p59 = scmp.eq.s32.totalorder %s14, 0
    %p60 = por %p58, %p59
    %p61 = scmp.ne.s32.totalorder %s50, %s53
    %p62 = scmp.eq.s32.totalorder %s19, 1
    %p63 = por %p61, %p62
    %p64 = scmp.ne.s32.totalorder %s53, %s54
    %p65 = scmp.eq.s32.totalorder %s19, 0
    %p66 = por %p64, %p65
    %p67 = scmp.ne.s32.totalorder %s53, %s54
    %p68 = scmp.eq.s32.totalorder %s20, 1
    %p69 = por %p67, %p68
    %p71 = scmp.ne.s32.totalorder %s54, %s70
    %p72 = scmp.eq.s32.totalorder %s20, 0
    %p73 = por %p71, %p72
    %s74 = ssub.s32 %s14, %s21
    %p75 = scmp.eq.s32.totalorder %s74, 0
    %s77 = sadd.s32 %s76, 1
    %s78 = scalar_select %p75, %s76, %s77
    %p81 = pneg %p75
    %p82 = scmp.eq.s32.totalorder %s14, 1
    %p83 = por %p81, %p82
    %p84 = scmp.ne.s32.totalorder %s76, %s79
    %p85 = scmp.eq.s32.totalorder %s14, 0
    %p86 = por %p84, %p85
    %p87 = scmp.ne.s32.totalorder %s76, %s79
    %p88 = scmp.eq.s32.totalorder %s19, 1
    %p89 = por %p87, %p88
    %p90 = scmp.ne.s32.totalorder %s79, %s80
    %p91 = scmp.eq.s32.totalorder %s19, 0
    %p92 = por %p90, %p91
    %p93 = scmp.ne.s32.totalorder %s79, %s80
    %p94 = scmp.eq.s32.totalorder %s20, 1
    %p95 = por %p93, %p94
    %p97 = scmp.ne.s32.totalorder %s80, %s96
    %p98 = scmp.eq.s32.totalorder %s20, 0
    %p99 = por %p97, %p98
    %s100 = ssub.s32 %s14, %s21
    %p101 = scmp.eq.s32.totalorder %s100, 0
    %s103 = sadd.s32 %s102, 1
    %s104 = scalar_select %p101, %s102, %s103
    %p107 = pneg %p101
    %p108 = scmp.eq.s32.totalorder %s14, 1
    %p109 = por %p107, %p108
    %p110 = scmp.ne.s32.totalorder %s102, %s105
    %p111 = scmp.eq.s32.totalorder %s14, 0
    %p112 = por %p110, %p111
    %p113 = scmp.ne.s32.totalorder %s102, %s105
    %p114 = scmp.eq.s32.totalorder %s19, 1
    %p115 = por %p113, %p114
    %p116 = scmp.ne.s32.totalorder %s105, %s106
    %p117 = scmp.eq.s32.totalorder %s19, 0
    %p118 = por %p116, %p117
    %p119 = scmp.ne.s32.totalorder %s105, %s106
    %p120 = scmp.eq.s32.totalorder %s20, 1
    %p121 = por %p119, %p120
    %p123 = scmp.ne.s32.totalorder %s106, %s122
    %p124 = scmp.eq.s32.totalorder %s20, 0
    %p125 = por %p123, %p124
    %s127 = sadd.s32 %s126, 1
    %p130 = scmp.eq.s32.totalorder %s14, 1
    %p131 = scmp.ne.s32.totalorder %s126, %s128
    %p132 = scmp.eq.s32.totalorder %s14, 0
    %p133 = por %p131, %p132
    %p134 = scmp.ne.s32.totalorder %s126, %s128
    %p135 = scmp.eq.s32.totalorder %s19, 1
    %p136 = por %p134, %p135
    %p137 = scmp.ne.s32.totalorder %s128, %s129
    %p138 = scmp.eq.s32.totalorder %s19, 0
    %p139 = por %p137, %p138
    %p140 = scmp.ne.s32.totalorder %s128, %s129
    %p141 = scmp.eq.s32.totalorder %s20, 1
    %p142 = por %p140, %p141
    %p144 = scmp.ne.s32.totalorder %s129, %s143
    %p145 = scmp.eq.s32.totalorder %s20, 0
    %p146 = por %p144, %p145
    %s147 = ssub.s32 %s14, %s21
    %p148 = scmp.eq.s32.totalorder %s147, 0
    %s150 = sadd.s32 %s149, 1
    %s151 = scalar_select %p148, %s149, %s150
    %p154 = pneg %p148
    %p155 = scmp.eq.s32.totalorder %s14, 1
    %p156 = por %p154, %p155
    %p157 = scmp.ne.s32.totalorder %s149, %s152
    %p158 = scmp.eq.s32.totalorder %s14, 0
    %p159 = por %p157, %p158
    %p160 = scmp.ne.s32.totalorder %s149, %s152
    %p161 = scmp.eq.s32.totalorder %s19, 1
    %p162 = por %p160, %p161
    %p163 = scmp.ne.s32.totalorder %s152, %s153
    %p164 = scmp.eq.s32.totalorder %s19, 0
    %p165 = por %p163, %p164
    %p166 = scmp.ne.s32.totalorder %s152, %s153
    %p167 = scmp.eq.s32.totalorder %s20, 1
    %p168 = por %p166, %p167
    %p170 = scmp.ne.s32.totalorder %s153, %s169
    %p171 = scmp.eq.s32.totalorder %s20, 0
    %p172 = por %p170, %p171
    %s173 = ssub.s32 %s14, %s21
    %p174 = scmp.eq.s32.totalorder %s173, 0
    %s176 = sadd.s32 %s175, 1
    %s177 = scalar_select %p174, %s175, %s176
    %p180 = pneg %p174
    %p181 = scmp.eq.s32.totalorder %s14, 1
    %p182 = por %p180, %p181
    %p183 = scmp.ne.s32.totalorder %s175, %s178
    %p184 = scmp.eq.s32.totalorder %s14, 0
    %p185 = por %p183, %p184
    %p186 = scmp.ne.s32.totalorder %s175, %s178
    %p187 = scmp.eq.s32.totalorder %s19, 1
    %p188 = por %p186, %p187
    %p189 = scmp.ne.s32.totalorder %s178, %s179
    %p190 = scmp.eq.s32.totalorder %s19, 0
    %p191 = por %p189, %p190
    %p192 = scmp.ne.s32.totalorder %s178, %s179
    %p193 = scmp.eq.s32.totalorder %s20, 1
    %p194 = por %p192, %p193
    %p196 = scmp.ne.s32.totalorder %s179, %s195
    %p197 = scmp.eq.s32.totalorder %s20, 0
    %p198 = por %p196, %p197
    %s199 = ssub.s32 %s14, %s21
    %p200 = scmp.eq.s32.totalorder %s199, 0
    %s202 = sadd.s32 %s201, 1
    %s203 = scalar_select %p200, %s201, %s202
    %p206 = pneg %p200
    %p207 = scmp.eq.s32.totalorder %s14, 1
    %p208 = por %p206, %p207
    %p209 = scmp.ne.s32.totalorder %s201, %s204
    %p210 = scmp.eq.s32.totalorder %s14, 0
    %p211 = por %p209, %p210
    %p212 = scmp.ne.s32.totalorder %s201, %s204
    %p213 = scmp.eq.s32.totalorder %s19, 1
    %p214 = por %p212, %p213
    %p215 = scmp.ne.s32.totalorder %s204, %s205
    %p216 = scmp.eq.s32.totalorder %s19, 0
    %p217 = por %p215, %p216
    %p218 = scmp.ne.s32.totalorder %s204, %s205
    %p219 = scmp.eq.s32.totalorder %s20, 1
    %p220 = por %p218, %p219
    %p222 = scmp.ne.s32.totalorder %s205, %s221
    %p223 = scmp.eq.s32.totalorder %s20, 0
    %p224 = por %p222, %p223
    %p225 = scmp.le.s32.totalorder 1, %s14
    %p226 = scmp.lt.s32.totalorder %s14, 3
    %p227 = pnand %p225, %p226
    %p228 = pneg %p227
    // Predicated region
    $region9: #{_lambda_.3} parent=5 // pred_check
      _
    $region10: #{_lambda_.3} parent=5 // pred_check_branch
      %230 = sbr.rel (%p227) target = $region12
    $region11: #{_lambda_.3} parent=5 // pred_region
      %s231 = ssub.s32 %s14, 1
      // Predicated region
      $region13: #{_lambda_.3} parent=11 // pred_check
        %p232 = pneg %p139
      $region14: #{_lambda_.3} parent=11 // pred_check_branch
        %234 = sbr.rel (%p232) target = $region16
      $region15: #{_lambda_.3} parent=11 // pred_region
        _
      $region16: #{_lambda_.3} parent=11 // pred_fallthru
        _
    $region12: #{_lambda_.3} parent=5 // pred_fallthru
      _
    %p235 = scmp.lt.s32.totalorder %s14, 2
    // Predicated region
    $region17: #{_lambda_.3} parent=5 // pred_check
      %p236 = pneg %p235
    $region18: #{_lambda_.3} parent=5 // pred_check_branch
      %238 = sbr.rel (%p236) target = $region20
    $region19: #{_lambda_.3} parent=5 // pred_region
      // Predicated region
      $region21: #{_lambda_.3} parent=19 // pred_check
        %p239 = pneg %p34
      $region22: #{_lambda_.3} parent=19 // pred_check_branch
        %241 = sbr.rel (%p239) target = $region24
      $region23: #{_lambda_.3} parent=19 // pred_region
        %p242 = scmp.lt.s32.totalorder %s14, 1
        %s243 = scalar_select %p242, %s14, 1
        %s244 = smul.addr %s243, 18
        %s245 = smul.addr %s244, 4
        %s246 = scalar_lea.vmem %s0, %s245
      $region24: #{_lambda_.3} parent=19 // pred_fallthru
        _
      // Predicated region
      $region25: #{_lambda_.3} parent=19 // pred_check
        %p247 = pneg %p60
      $region26: #{_lambda_.3} parent=19 // pred_check_branch
        %249 = sbr.rel (%p247) target = $region28
      $region27: #{_lambda_.3} parent=19 // pred_region
        %p250 = scmp.lt.s32.totalorder %s14, 1
        %s251 = scalar_select %p250, %s14, 1
        %s252 = smul.addr %s251, 18
        %s253 = smul.addr %s252, 4
        %s254 = scalar_lea.vmem %s1, %s253
      $region28: #{_lambda_.3} parent=19 // pred_fallthru
        _
      // Predicated region
      $region29: #{_lambda_.3} parent=19 // pred_check
        %p255 = pneg %p86
      $region30: #{_lambda_.3} parent=19 // pred_check_branch
        %257 = sbr.rel (%p255) target = $region32
      $region31: #{_lambda_.3} parent=19 // pred_region
        %p258 = scmp.lt.s32.totalorder %s14, 1
        %s259 = scalar_select %p258, %s14, 1
        %s260 = smul.addr %s259, 18
        %s261 = smul.addr %s260, 4
        %s262 = scalar_lea.vmem %s2, %s261
      $region32: #{_lambda_.3} parent=19 // pred_fallthru
        _
      // Predicated region
      $region33: #{_lambda_.3} parent=19 // pred_check
        %p263 = pneg %p112
      $region34: #{_lambda_.3} parent=19 // pred_check_branch
        %265 = sbr.rel (%p263) target = $region36
      $region35: #{_lambda_.3} parent=19 // pred_region
        %p266 = scmp.lt.s32.totalorder %s14, 1
        %s267 = scalar_select %p266, %s14, 1
        %s268 = smul.addr %s267, 18
        %s269 = smul.addr %s268, 4
        %s270 = scalar_lea.vmem %s3, %s269
      $region36: #{_lambda_.3} parent=19 // pred_fallthru
        _
    $region20: #{_lambda_.3} parent=5 // pred_fallthru
      _
    %p271 = scmp.le.s32.totalorder 1, %s14
    %p272 = scmp.lt.s32.totalorder %s14, 3
    %p273 = pnand %p271, %p272
    %p274 = pneg %p273
    // Predicated region
    $region37: #{_lambda_.3} parent=5 // pred_check
      _
    $region38: #{_lambda_.3} parent=5 // pred_check_branch
      %276 = sbr.rel (%p273) target = $region40
    $region39: #{_lambda_.3} parent=5 // pred_region
      %s277 = ssub.s32 %s14, 1
      %p278 = scmp.lt.s32.totalorder %s19, 1
      %s279 = scalar_select %p278, %s19, 1
      %s280 = smul.addr %s279, 18
      %s281 = smul.addr %s280, 4
      %s282 = scalar_lea.vmem %s0, %s281
      %p283 = pneg %p40
      %p284 = pneg %p37
      %p285 = scmp.lt.s32.totalorder %s19, 1
      %s286 = scalar_select %p285, %s19, 1
      %s287 = smul.addr %s286, 18
      %s288 = smul.addr %s287, 4
      %s289 = scalar_lea.vmem %s1, %s288
      %p290 = pneg %p66
      %p291 = pneg %p63
      %p292 = scmp.lt.s32.totalorder %s19, 1
      %s293 = scalar_select %p292, %s19, 1
      %s294 = smul.addr %s293, 18
      %s295 = smul.addr %s294, 4
      %s296 = scalar_lea.vmem %s2, %s295
      %p297 = pneg %p92
      %p298 = pneg %p89
      %p299 = scmp.lt.s32.totalorder %s19, 1
      %s300 = scalar_select %p299, %s19, 1
      %s301 = smul.addr %s300, 18
      %s302 = smul.addr %s301, 4
      %s303 = scalar_lea.vmem %s3, %s302
      %p304 = pneg %p118
      %p305 = pneg %p115
      %p306 = pneg %p139
      %p307 = pneg %p136
      %p308 = pneg %p165
      %p309 = pneg %p162
      %p310 = scmp.lt.s32.totalorder %s19, 1
      %s311 = scalar_select %p310, %s19, 1
      %s312 = smul.addr %s311, 8
      %s313 = smul.addr %s312, 4
      %s314 = scalar_lea.vmem %s5, %s313
      %p315 = pneg %p191
      %p316 = pneg %p188
      %p317 = scmp.lt.s32.totalorder %s19, 1
      %s318 = scalar_select %p317, %s19, 1
      %s319 = smul.addr %s318, 8
      %s320 = smul.addr %s319, 4
      %s321 = scalar_lea.vmem %s6, %s320
      %p322 = pneg %p217
      %p323 = pneg %p214
      %p324 = scmp.lt.s32.totalorder %s19, 1
      %s325 = scalar_select %p324, %s19, 1
      %s326 = smul.addr %s325, 2
      %s327 = scalar_lea.vmem %s7, %s326
      %p328 = scmp.lt.s32.totalorder %s19, 1
      %s329 = scalar_select %p328, %s19, 1
      %s330 = smul.addr %s329, 18
      %s331 = smul.addr %s330, 4
      %s332 = scalar_lea.vmem %s0, %s331
      %p333 = scmp.lt.s32.totalorder %s19, 1
      %s334 = scalar_select %p333, %s19, 1
      %s335 = smul.addr %s334, 18
      %s336 = smul.addr %s335, 4
      %s337 = scalar_lea.vmem %s1, %s336
      %p338 = scmp.lt.s32.totalorder %s19, 1
      %s339 = scalar_select %p338, %s19, 1
      %s340 = smul.addr %s339, 18
      %s341 = smul.addr %s340, 4
      %s342 = scalar_lea.vmem %s2, %s341
      %p343 = scmp.lt.s32.totalorder %s19, 1
      %s344 = scalar_select %p343, %s19, 1
      %s345 = smul.addr %s344, 18
      %s346 = smul.addr %s345, 4
      %s347 = scalar_lea.vmem %s3, %s346
      %p348 = scmp.lt.s32.totalorder %s19, 1
      %s349 = scalar_select %p348, %s19, 1
      %s350 = smul.addr %s349, 8
      %s351 = smul.addr %s350, 4
      %s352 = scalar_lea.vmem %s5, %s351
      %p353 = scmp.lt.s32.totalorder %s19, 1
      %s354 = scalar_select %p353, %s19, 1
      %s355 = smul.addr %s354, 8
      %s356 = smul.addr %s355, 4
      %s357 = scalar_lea.vmem %s6, %s356
      %p358 = scmp.lt.s32.totalorder %s19, 1
      %s359 = scalar_select %p358, %s19, 1
      %s360 = smul.addr %s359, 2
      %s361 = scalar_lea.vmem %s7, %s360
      %v363 = vld [vmem:[%s332] sm:$0xf]
      %v364 = vld [vmem:[%s332 + $0x8] sm:$0xf]
      %v365 = vld [vmem:[%s332 + $0x10] sm:$0xf]
      %v366 = vld [vmem:[%s332 + $0x18] sm:$0xf]
      %v367 = vld [vmem:[%s332 + $0x20] sm:$0xf]
      %v368 = vld [vmem:[%s332 + $0x28] sm:$0xf]
      %v369 = vld [vmem:[%s332 + $0x30] sm:$0xf]
      %v370 = vld [vmem:[%s332 + $0x38] sm:$0xf]
      %v371 = vld [vmem:[%s337] sm:$0xf]
      %v372 = vld [vmem:[%s337 + $0x8] sm:$0xf]
      %v373 = vld [vmem:[%s337 + $0x10] sm:$0xf]
      %v374 = vld [vmem:[%s337 + $0x18] sm:$0xf]
      %v375 = vld [vmem:[%s337 + $0x20] sm:$0xf]
      %v376 = vld [vmem:[%s337 + $0x28] sm:$0xf]
      %v377 = vld [vmem:[%s337 + $0x30] sm:$0xf]
      %v378 = vld [vmem:[%s337 + $0x38] sm:$0xf]
      %v379 = vld [vmem:[%s332 + $0x4] sm:$0x1]
      %v380 = vld [vmem:[%s332 + $0xc] sm:$0x1]
      %v381 = vld [vmem:[%s332 + $0x14] sm:$0x1]
      %v382 = vld [vmem:[%s332 + $0x1c] sm:$0x1]
      %v383 = vld [vmem:[%s332 + $0x24] sm:$0x1]
      %v384 = vld [vmem:[%s332 + $0x2c] sm:$0x1]
      %v385 = vld [vmem:[%s332 + $0x34] sm:$0x1]
      %v386 = vld [vmem:[%s332 + $0x3c] sm:$0x1]
      %vm387 = vsmask.f32 3328
      %vm388 = vsmask.f32 7440
      %vm389 = vmor %vm387, %vm388
      %v391 = vshrl.u32 %v363, 16
      %v393 = vrot.slane %v391, 4
      %v394 = vshll.u32 %v363, 16
      %v396 = vrot.slane %v394, 5
      %v397 = vor.u32 %v393, %v396
      %v398 = vrot.slane %v397, 4
      %v400 = vshll.u32 %v379, 16
      %v402 = vrot.slane %v400, 5
      %v403 = vsel %vm389, %v398, %v402
      %v405 = vshrl.u32 %v364, 16
      %v407 = vrot.slane %v405, 4
      %v408 = vshll.u32 %v364, 16
      %v410 = vrot.slane %v408, 5
      %v411 = vor.u32 %v407, %v410
      %v412 = vrot.slane %v411, 4
      %v414 = vshll.u32 %v380, 16
      %v416 = vrot.slane %v414, 5
      %v417 = vsel %vm389, %v412, %v416
      %v419 = vshrl.u32 %v365, 16
      %v421 = vrot.slane %v419, 4
      %v422 = vshll.u32 %v365, 16
      %v424 = vrot.slane %v422, 5
      %v425 = vor.u32 %v421, %v424
      %v426 = vrot.slane %v425, 4
      %v428 = vshll.u32 %v381, 16
      %v430 = vrot.slane %v428, 5
      %v431 = vsel %vm389, %v426, %v430
      %v433 = vshrl.u32 %v366, 16
      %v435 = vrot.slane %v433, 4
      %v436 = vshll.u32 %v366, 16
      %v438 = vrot.slane %v436, 5
      %v439 = vor.u32 %v435, %v438
      %v440 = vrot.slane %v439, 4
      %v442 = vshll.u32 %v382, 16
      %v444 = vrot.slane %v442, 5
      %v445 = vsel %vm389, %v440, %v444
      %v447 = vshrl.u32 %v367, 16
      %v449 = vrot.slane %v447, 4
      %v450 = vshll.u32 %v367, 16
      %v452 = vrot.slane %v450, 5
      %v453 = vor.u32 %v449, %v452
      %v454 = vrot.slane %v453, 4
      %v456 = vshll.u32 %v383, 16
      %v458 = vrot.slane %v456, 5
      %v459 = vsel %vm389, %v454, %v458
      %v461 = vshrl.u32 %v368, 16
      %v463 = vrot.slane %v461, 4
      %v464 = vshll.u32 %v368, 16
      %v466 = vrot.slane %v464, 5
      %v467 = vor.u32 %v463, %v466
      %v468 = vrot.slane %v467, 4
      %v470 = vshll.u32 %v384, 16
      %v472 = vrot.slane %v470, 5
      %v473 = vsel %vm389, %v468, %v472
      %v475 = vshrl.u32 %v369, 16
      %v477 = vrot.slane %v475, 4
      %v478 = vshll.u32 %v369, 16
      %v480 = vrot.slane %v478, 5
      %v481 = vor.u32 %v477, %v480
      %v482 = vrot.slane %v481, 4
      %v484 = vshll.u32 %v385, 16
      %v486 = vrot.slane %v484, 5
      %v487 = vsel %vm389, %v482, %v486
      %v489 = vshrl.u32 %v370, 16
      %v491 = vrot.slane %v489, 4
      %v492 = vshll.u32 %v370, 16
      %v494 = vrot.slane %v492, 5
      %v495 = vor.u32 %v491, %v494
      %v496 = vrot.slane %v495, 4
      %v498 = vshll.u32 %v386, 16
      %v500 = vrot.slane %v498, 5
      %v501 = vsel %vm389, %v496, %v500
      %v502 = vld [vmem:[%s342] sm:$0xf]
      %v503 = vld [vmem:[%s342 + $0x8] sm:$0xf]
      %v504 = vld [vmem:[%s342 + $0x10] sm:$0xf]
      %v505 = vld [vmem:[%s342 + $0x18] sm:$0xf]
      %v506 = vld [vmem:[%s342 + $0x20] sm:$0xf]
      %v507 = vld [vmem:[%s342 + $0x28] sm:$0xf]
      %v508 = vld [vmem:[%s342 + $0x30] sm:$0xf]
      %v509 = vld [vmem:[%s342 + $0x38] sm:$0xf]
      %v510 = vld [vmem:[%s347] sm:$0xf]
      %v511 = vld [vmem:[%s347 + $0x8] sm:$0xf]
      %v512 = vld [vmem:[%s347 + $0x10] sm:$0xf]
      %v513 = vld [vmem:[%s347 + $0x18] sm:$0xf]
      %v514 = vld [vmem:[%s347 + $0x20] sm:$0xf]
      %v515 = vld [vmem:[%s347 + $0x28] sm:$0xf]
      %v516 = vld [vmem:[%s347 + $0x30] sm:$0xf]
      %v517 = vld [vmem:[%s347 + $0x38] sm:$0xf]
      %v518 = vld [vmem:[%s342 + $0x4] sm:$0x1]
      %v519 = vld [vmem:[%s342 + $0xc] sm:$0x1]
      %v520 = vld [vmem:[%s342 + $0x14] sm:$0x1]
      %v521 = vld [vmem:[%s342 + $0x1c] sm:$0x1]
      %v522 = vld [vmem:[%s342 + $0x24] sm:$0x1]
      %v523 = vld [vmem:[%s342 + $0x2c] sm:$0x1]
      %v524 = vld [vmem:[%s342 + $0x34] sm:$0x1]
      %v525 = vld [vmem:[%s342 + $0x3c] sm:$0x1]
      %v527 = vshrl.u32 %v502, 16
      %v529 = vrot.slane %v527, 4
      %v530 = vshll.u32 %v502, 16
      %v532 = vrot.slane %v530, 5
      %v533 = vor.u32 %v529, %v532
      %v534 = vrot.slane %v533, 4
      %v536 = vshll.u32 %v518, 16
      %v538 = vrot.slane %v536, 5
      %v539 = vsel %vm389, %v534, %v538
      %v541 = vshrl.u32 %v503, 16
      %v543 = vrot.slane %v541, 4
      %v544 = vshll.u32 %v503, 16
      %v546 = vrot.slane %v544, 5
      %v547 = vor.u32 %v543, %v546
      %v548 = vrot.slane %v547, 4
      %v550 = vshll.u32 %v519, 16
      %v552 = vrot.slane %v550, 5
      %v553 = vsel %vm389, %v548, %v552
      %v555 = vshrl.u32 %v504, 16
      %v557 = vrot.slane %v555, 4
      %v558 = vshll.u32 %v504, 16
      %v560 = vrot.slane %v558, 5
      %v561 = vor.u32 %v557, %v560
      %v562 = vrot.slane %v561, 4
      %v564 = vshll.u32 %v520, 16
      %v566 = vrot.slane %v564, 5
      %v567 = vsel %vm389, %v562, %v566
      %v569 = vshrl.u32 %v505, 16
      %v571 = vrot.slane %v569, 4
      %v572 = vshll.u32 %v505, 16
      %v574 = vrot.slane %v572, 5
      %v575 = vor.u32 %v571, %v574
      %v576 = vrot.slane %v575, 4
      %v578 = vshll.u32 %v521, 16
      %v580 = vrot.slane %v578, 5
      %v581 = vsel %vm389, %v576, %v580
      %v583 = vshrl.u32 %v506, 16
      %v585 = vrot.slane %v583, 4
      %v586 = vshll.u32 %v506, 16
      %v588 = vrot.slane %v586, 5
      %v589 = vor.u32 %v585, %v588
      %v590 = vrot.slane %v589, 4
      %v592 = vshll.u32 %v522, 16
      %v594 = vrot.slane %v592, 5
      %v595 = vsel %vm389, %v590, %v594
      %v597 = vshrl.u32 %v507, 16
      %v599 = vrot.slane %v597, 4
      %v600 = vshll.u32 %v507, 16
      %v602 = vrot.slane %v600, 5
      %v603 = vor.u32 %v599, %v602
      %v604 = vrot.slane %v603, 4
      %v606 = vshll.u32 %v523, 16
      %v608 = vrot.slane %v606, 5
      %v609 = vsel %vm389, %v604, %v608
      %v611 = vshrl.u32 %v508, 16
      %v613 = vrot.slane %v611, 4
      %v614 = vshll.u32 %v508, 16
      %v616 = vrot.slane %v614, 5
      %v617 = vor.u32 %v613, %v616
      %v618 = vrot.slane %v617, 4
      %v620 = vshll.u32 %v524, 16
      %v622 = vrot.slane %v620, 5
      %v623 = vsel %vm389, %v618, %v622
      %v625 = vshrl.u32 %v509, 16
      %v627 = vrot.slane %v625, 4
      %v628 = vshll.u32 %v509, 16
      %v630 = vrot.slane %v628, 5
      %v631 = vor.u32 %v627, %v630
      %v632 = vrot.slane %v631, 4
      %v634 = vshll.u32 %v525, 16
      %v636 = vrot.slane %v634, 5
      %v637 = vsel %vm389, %v632, %v636
      %s638 = scalar_lea.vmem %s332, 8
      %v639 = vld [vmem:[%s638] sm:$0xf]
      %v640 = vld [vmem:[%s638 + $0x8] sm:$0xf]
      %v641 = vld [vmem:[%s638 + $0x10] sm:$0xf]
      %v642 = vld [vmem:[%s638 + $0x18] sm:$0xf]
      %v643 = vld [vmem:[%s638 + $0x20] sm:$0xf]
      %v644 = vld [vmem:[%s638 + $0x28] sm:$0xf]
      %v645 = vld [vmem:[%s638 + $0x30] sm:$0xf]
      %v646 = vld [vmem:[%s638 + $0x38] sm:$0xf]
      %s647 = scalar_lea.vmem %s337, 8
      %v648 = vld [vmem:[%s647] sm:$0xf]
      %v649 = vld [vmem:[%s647 + $0x8] sm:$0xf]
      %v650 = vld [vmem:[%s647 + $0x10] sm:$0xf]
      %v651 = vld [vmem:[%s647 + $0x18] sm:$0xf]
      %v652 = vld [vmem:[%s647 + $0x20] sm:$0xf]
      %v653 = vld [vmem:[%s647 + $0x28] sm:$0xf]
      %v654 = vld [vmem:[%s647 + $0x30] sm:$0xf]
      %v655 = vld [vmem:[%s647 + $0x38] sm:$0xf]
      %v656 = vld [vmem:[%s638 + $0x4] sm:$0x1]
      %v657 = vld [vmem:[%s638 + $0xc] sm:$0x1]
      %v658 = vld [vmem:[%s638 + $0x14] sm:$0x1]
      %v659 = vld [vmem:[%s638 + $0x1c] sm:$0x1]
      %v660 = vld [vmem:[%s638 + $0x24] sm:$0x1]
      %v661 = vld [vmem:[%s638 + $0x2c] sm:$0x1]
      %v662 = vld [vmem:[%s638 + $0x34] sm:$0x1]
      %v663 = vld [vmem:[%s638 + $0x3c] sm:$0x1]
      %v665 = vshrl.u32 %v639, 16
      %v667 = vrot.slane %v665, 4
      %v668 = vshll.u32 %v639, 16
      %v670 = vrot.slane %v668, 5
      %v671 = vor.u32 %v667, %v670
      %v672 = vrot.slane %v671, 4
      %v674 = vshll.u32 %v656, 16
      %v676 = vrot.slane %v674, 5
      %v677 = vsel %vm389, %v672, %v676
      %v679 = vshrl.u32 %v640, 16
      %v681 = vrot.slane %v679, 4
      %v682 = vshll.u32 %v640, 16
      %v684 = vrot.slane %v682, 5
      %v685 = vor.u32 %v681, %v684
      %v686 = vrot.slane %v685, 4
      %v688 = vshll.u32 %v657, 16
      %v690 = vrot.slane %v688, 5
      %v691 = vsel %vm389, %v686, %v690
      %v693 = vshrl.u32 %v641, 16
      %v695 = vrot.slane %v693, 4
      %v696 = vshll.u32 %v641, 16
      %v698 = vrot.slane %v696, 5
      %v699 = vor.u32 %v695, %v698
      %v700 = vrot.slane %v699, 4
      %v702 = vshll.u32 %v658, 16
      %v704 = vrot.slane %v702, 5
      %v705 = vsel %vm389, %v700, %v704
      %v707 = vshrl.u32 %v642, 16
      %v709 = vrot.slane %v707, 4
      %v710 = vshll.u32 %v642, 16
      %v712 = vrot.slane %v710, 5
      %v713 = vor.u32 %v709, %v712
      %v714 = vrot.slane %v713, 4
      %v716 = vshll.u32 %v659, 16
      %v718 = vrot.slane %v716, 5
      %v719 = vsel %vm389, %v714, %v718
      %v721 = vshrl.u32 %v643, 16
      %v723 = vrot.slane %v721, 4
      %v724 = vshll.u32 %v643, 16
      %v726 = vrot.slane %v724, 5
      %v727 = vor.u32 %v723, %v726
      %v728 = vrot.slane %v727, 4
      %v730 = vshll.u32 %v660, 16
      %v732 = vrot.slane %v730, 5
      %v733 = vsel %vm389, %v728, %v732
      %v735 = vshrl.u32 %v644, 16
      %v737 = vrot.slane %v735, 4
      %v738 = vshll.u32 %v644, 16
      %v740 = vrot.slane %v738, 5
      %v741 = vor.u32 %v737, %v740
      %v742 = vrot.slane %v741, 4
      %v744 = vshll.u32 %v661, 16
      %v746 = vrot.slane %v744, 5
      %v747 = vsel %vm389, %v742, %v746
      %v749 = vshrl.u32 %v645, 16
      %v751 = vrot.slane %v749, 4
      %v752 = vshll.u32 %v645, 16
      %v754 = vrot.slane %v752, 5
      %v755 = vor.u32 %v751, %v754
      %v756 = vrot.slane %v755, 4
      %v758 = vshll.u32 %v662, 16
      %v760 = vrot.slane %v758, 5
      %v761 = vsel %vm389, %v756, %v760
      %v763 = vshrl.u32 %v646, 16
      %v765 = vrot.slane %v763, 4
      %v766 = vshll.u32 %v646, 16
      %v768 = vrot.slane %v766, 5
      %v769 = vor.u32 %v765, %v768
      %v770 = vrot.slane %v769, 4
      %v772 = vshll.u32 %v663, 16
      %v774 = vrot.slane %v772, 5
      %v775 = vsel %vm389, %v770, %v774
      %v784 = vunpack.c.l.b16 %v363
      %v785 = vunpack.c.l.b16 %v364
      %v786 = vunpack.c.l.b16 %v365
      %v787 = vunpack.c.l.b16 %v366
      %v788 = vunpack.c.l.b16 %v367
      %v789 = vunpack.c.l.b16 %v368
      %v790 = vunpack.c.l.b16 %v369
      %v791 = vunpack.c.l.b16 %v370
      %v792 = vpack.c.b16 %v785, %v784
      %v793 = vpack.c.b16 %v787, %v786
      %v794 = vpack.c.b16 %v789, %v788
      %v795 = vpack.c.b16 %v791, %v790
      %v804 = vunpack.c.l.b16 %v371
      %v805 = vunpack.c.l.b16 %v372
      %v806 = vunpack.c.l.b16 %v373
      %v807 = vunpack.c.l.b16 %v374
      %v808 = vunpack.c.l.b16 %v375
      %v809 = vunpack.c.l.b16 %v376
      %v810 = vunpack.c.l.b16 %v377
      %v811 = vunpack.c.l.b16 %v378
      %v812 = vpack.c.b16 %v805, %v804
      %v813 = vpack.c.b16 %v807, %v806
      %v814 = vpack.c.b16 %v809, %v808
      %v815 = vpack.c.b16 %v811, %v810
      %816 = vrot.lane.b32.xlu0 %v812, 16
      %v817 = vpop.permute.xlu0 %816
      %818 = vrot.lane.b32.xlu0 %v813, 16
      %v819 = vpop.permute.xlu0 %818
      %820 = vrot.lane.b32.xlu0 %v814, 16
      %v821 = vpop.permute.xlu0 %820
      %822 = vrot.lane.b32.xlu0 %v815, 16
      %v823 = vpop.permute.xlu0 %822
      %v824 = vunpack.c.l.b16 %v403
      %v825 = vunpack.c.l.b16 %v417
      %v826 = vunpack.c.l.b16 %v431
      %v827 = vunpack.c.l.b16 %v445
      %v828 = vunpack.c.l.b16 %v459
      %v829 = vunpack.c.l.b16 %v473
      %v830 = vunpack.c.l.b16 %v487
      %v831 = vunpack.c.l.b16 %v501
      %v832 = vpack.c.b16 %v825, %v824
      %v833 = vpack.c.b16 %v827, %v826
      %v834 = vpack.c.b16 %v829, %v828
      %v835 = vpack.c.b16 %v831, %v830
      %836 = vrot.lane.b32.xlu0 %v832, 32
      %v837 = vpop.permute.xlu0 %836
      %838 = vrot.lane.b32.xlu0 %v833, 32
      %v839 = vpop.permute.xlu0 %838
      %840 = vrot.lane.b32.xlu0 %v834, 32
      %v841 = vpop.permute.xlu0 %840
      %842 = vrot.lane.b32.xlu0 %v835, 32
      %v843 = vpop.permute.xlu0 %842
      %v852 = vunpack.c.l.b16 %v502
      %v853 = vunpack.c.l.b16 %v503
      %v854 = vunpack.c.l.b16 %v504
      %v855 = vunpack.c.l.b16 %v505
      %v856 = vunpack.c.l.b16 %v506
      %v857 = vunpack.c.l.b16 %v507
      %v858 = vunpack.c.l.b16 %v508
      %v859 = vunpack.c.l.b16 %v509
      %v860 = vpack.c.b16 %v853, %v852
      %v861 = vpack.c.b16 %v855, %v854
      %v862 = vpack.c.b16 %v857, %v856
      %v863 = vpack.c.b16 %v859, %v858
      %864 = vrot.lane.b32.xlu0 %v860, 48
      %v865 = vpop.permute.xlu0 %864
      %866 = vrot.lane.b32.xlu0 %v861, 48
      %v867 = vpop.permute.xlu0 %866
      %868 = vrot.lane.b32.xlu0 %v862, 48
      %v869 = vpop.permute.xlu0 %868
      %870 = vrot.lane.b32.xlu0 %v863, 48
      %v871 = vpop.permute.xlu0 %870
      %v880 = vunpack.c.l.b16 %v510
      %v881 = vunpack.c.l.b16 %v511
      %v882 = vunpack.c.l.b16 %v512
      %v883 = vunpack.c.l.b16 %v513
      %v884 = vunpack.c.l.b16 %v514
      %v885 = vunpack.c.l.b16 %v515
      %v886 = vunpack.c.l.b16 %v516
      %v887 = vunpack.c.l.b16 %v517
      %v888 = vpack.c.b16 %v881, %v880
      %v889 = vpack.c.b16 %v883, %v882
      %v890 = vpack.c.b16 %v885, %v884
      %v891 = vpack.c.b16 %v887, %v886
      %892 = vrot.lane.b32.xlu0 %v888, 64
      %v893 = vpop.permute.xlu0 %892
      %894 = vrot.lane.b32.xlu0 %v889, 64
      %v895 = vpop.permute.xlu0 %894
      %896 = vrot.lane.b32.xlu0 %v890, 64
      %v897 = vpop.permute.xlu0 %896
      %898 = vrot.lane.b32.xlu0 %v891, 64
      %v899 = vpop.permute.xlu0 %898
      %v900 = vunpack.c.l.b16 %v539
      %v901 = vunpack.c.l.b16 %v553
      %v902 = vunpack.c.l.b16 %v567
      %v903 = vunpack.c.l.b16 %v581
      %v904 = vunpack.c.l.b16 %v595
      %v905 = vunpack.c.l.b16 %v609
      %v906 = vunpack.c.l.b16 %v623
      %v907 = vunpack.c.l.b16 %v637
      %v908 = vpack.c.b16 %v901, %v900
      %v909 = vpack.c.b16 %v903, %v902
      %v910 = vpack.c.b16 %v905, %v904
      %v911 = vpack.c.b16 %v907, %v906
      %912 = vrot.lane.b32.xlu0 %v908, 80
      %v913 = vpop.permute.xlu0 %912
      %914 = vrot.lane.b32.xlu0 %v909, 80
      %v915 = vpop.permute.xlu0 %914
      %916 = vrot.lane.b32.xlu0 %v910, 80
      %v917 = vpop.permute.xlu0 %916
      %918 = vrot.lane.b32.xlu0 %v911, 80
      %v919 = vpop.permute.xlu0 %918
      %v928 = vunpack.c.l.b16 %v639
      %v929 = vunpack.c.l.b16 %v640
      %v930 = vunpack.c.l.b16 %v641
      %v931 = vunpack.c.l.b16 %v642
      %v932 = vunpack.c.l.b16 %v643
      %v933 = vunpack.c.l.b16 %v644
      %v934 = vunpack.c.l.b16 %v645
      %v935 = vunpack.c.l.b16 %v646
      %v936 = vpack.c.b16 %v929, %v928
      %v937 = vpack.c.b16 %v931, %v930
      %v938 = vpack.c.b16 %v933, %v932
      %v939 = vpack.c.b16 %v935, %v934
      %940 = vrot.lane.b32.xlu0 %v936, 96
      %v941 = vpop.permute.xlu0 %940
      %942 = vrot.lane.b32.xlu0 %v937, 96
      %v943 = vpop.permute.xlu0 %942
      %944 = vrot.lane.b32.xlu0 %v938, 96
      %v945 = vpop.permute.xlu0 %944
      %946 = vrot.lane.b32.xlu0 %v939, 96
      %v947 = vpop.permute.xlu0 %946
      %v956 = vunpack.c.l.b16 %v648
      %v957 = vunpack.c.l.b16 %v649
      %v958 = vunpack.c.l.b16 %v650
      %v959 = vunpack.c.l.b16 %v651
      %v960 = vunpack.c.l.b16 %v652
      %v961 = vunpack.c.l.b16 %v653
      %v962 = vunpack.c.l.b16 %v654
      %v963 = vunpack.c.l.b16 %v655
      %v964 = vpack.c.b16 %v957, %v956
      %v965 = vpack.c.b16 %v959, %v958
      %v966 = vpack.c.b16 %v961, %v960
      %v967 = vpack.c.b16 %v963, %v962
      %968 = vrot.lane.b32.xlu0 %v964, 112
      %v969 = vpop.permute.xlu0 %968
      %970 = vrot.lane.b32.xlu0 %v965, 112
      %v971 = vpop.permute.xlu0 %970
      %972 = vrot.lane.b32.xlu0 %v966, 112
      %v973 = vpop.permute.xlu0 %972
      %974 = vrot.lane.b32.xlu0 %v967, 112
      %v975 = vpop.permute.xlu0 %974
      %v976 = vunpack.c.l.b16 %v677
      %v977 = vunpack.c.l.b16 %v691
      %v978 = vunpack.c.l.b16 %v705
      %v979 = vunpack.c.l.b16 %v719
      %v980 = vunpack.c.l.b16 %v733
      %v981 = vunpack.c.l.b16 %v747
      %v982 = vunpack.c.l.b16 %v761
      %v983 = vunpack.c.l.b16 %v775
      %v984 = vpack.c.b16 %v977, %v976
      %v985 = vpack.c.b16 %v979, %v978
      %v986 = vpack.c.b16 %v981, %v980
      %v987 = vpack.c.b16 %v983, %v982
      %vm988 = vcmask 130048
      %v991 = vsel %vm988, %v792, %v817
      %v994 = vsel %vm988, %v793, %v819
      %v997 = vsel %vm988, %v794, %v821
      %v1000 = vsel %vm988, %v795, %v823
      %vm1001 = vcmask 261120
      %v1003 = vsel %vm1001, %v991, %v837
      %v1005 = vsel %vm1001, %v994, %v839
      %v1007 = vsel %vm1001, %v997, %v841
      %v1009 = vsel %vm1001, %v1000, %v843
      %vm1010 = vcmask 392192
      %v1012 = vsel %vm1010, %v1003, %v865
      %v1014 = vsel %vm1010, %v1005, %v867
      %v1016 = vsel %vm1010, %v1007, %v869
      %v1018 = vsel %vm1010, %v1009, %v871
      %vm1019 = vcmask 523264
      %v1021 = vsel %vm1019, %v1012, %v893
      %v1023 = vsel %vm1019, %v1014, %v895
      %v1025 = vsel %vm1019, %v1016, %v897
      %v1027 = vsel %vm1019, %v1018, %v899
      %vm1028 = vcmask 654336
      %v1030 = vsel %vm1028, %v1021, %v913
      %v1032 = vsel %vm1028, %v1023, %v915
      %v1034 = vsel %vm1028, %v1025, %v917
      %v1036 = vsel %vm1028, %v1027, %v919
      %vm1037 = vcmask 785408
      %v1039 = vsel %vm1037, %v1030, %v941
      %v1041 = vsel %vm1037, %v1032, %v943
      %v1043 = vsel %vm1037, %v1034, %v945
      %v1045 = vsel %vm1037, %v1036, %v947
      %vm1046 = vcmask 916480
      %v1048 = vsel %vm1046, %v1039, %v969
      %v1051 = vsel %vm1046, %v1041, %v971
      %v1054 = vsel %vm1046, %v1043, %v973
      %v1057 = vsel %vm1046, %v1045, %v975
      %v1059 = vld [vmem:[%s4] sm:$0xf]
      %v1060 = vld [vmem:[%s4 + $0x4] sm:$0xf]
      %v1061 = vld [vmem:[%s4 + $0x8] sm:$0xf]
      %v1062 = vld [vmem:[%s4 + $0xc] sm:$0xf]
      %v1063 = vld [vmem:[%s4 + $0x10] sm:$0xf]
      %v1064 = vld [vmem:[%s4 + $0x14] sm:$0xf]
      %v1065 = vld [vmem:[%s4 + $0x18] sm:$0xf]
      %v1066 = vld [vmem:[%s4 + $0x1c] sm:$0xf]
      %v1067 = vld [vmem:[%s4 + $0x20] sm:$0xf]
      %v1068 = vld [vmem:[%s4 + $0x24] sm:$0xf]
      %v1069 = vld [vmem:[%s4 + $0x28] sm:$0xf]
      %v1070 = vld [vmem:[%s4 + $0x2c] sm:$0xf]
      %v1071 = vld [vmem:[%s4 + $0x30] sm:$0xf]
      %v1072 = vld [vmem:[%s4 + $0x34] sm:$0xf]
      %v1073 = vld [vmem:[%s4 + $0x38] sm:$0xf]
      %v1074 = vld [vmem:[%s4 + $0x3c] sm:$0xf]
      %v1075 = vld [vmem:[%s4 + $0x40] sm:$0xf]
      %v1076 = vld [vmem:[%s4 + $0x44] sm:$0xf]
      %v1095 = vunpack.c.l.b16 %v1059
      %v1096 = vunpack.c.l.b16 %v1060
      %v1097 = vunpack.c.l.b16 %v1061
      %v1098 = vunpack.c.l.b16 %v1062
      %v1099 = vunpack.c.l.b16 %v1063
      %v1100 = vunpack.c.l.b16 %v1064
      %v1101 = vunpack.c.l.b16 %v1065
      %v1102 = vunpack.c.l.b16 %v1066
      %v1103 = vunpack.c.l.b16 %v1067
      %v1104 = vunpack.c.l.b16 %v1068
      %v1105 = vunpack.c.l.b16 %v1069
      %v1106 = vunpack.c.l.b16 %v1070
      %v1107 = vunpack.c.l.b16 %v1071
      %v1108 = vunpack.c.l.b16 %v1072
      %v1109 = vunpack.c.l.b16 %v1073
      %v1110 = vunpack.c.l.b16 %v1074
      %v1111 = vunpack.c.l.b16 %v1075
      %v1112 = vunpack.c.l.b16 %v1076
      %v1113 = vpack.c.b16 %v1096, %v1095
      %v1114 = vpack.c.b16 %v1098, %v1097
      %v1115 = vpack.c.b16 %v1100, %v1099
      %v1116 = vpack.c.b16 %v1102, %v1101
      %v1117 = vpack.c.b16 %v1104, %v1103
      %v1118 = vpack.c.b16 %v1106, %v1105
      %v1119 = vpack.c.b16 %v1108, %v1107
      %v1120 = vpack.c.b16 %v1110, %v1109
      %v1121 = vpack.c.b16 %v1112, %v1111
      %v1132 = vsel %vm988, %v984, 0
      %v1135 = vsel %vm988, %v985, 0
      %v1138 = vsel %vm988, %v986, 0
      %v1141 = vsel %vm988, %v987, 0
      %1143 = vmatpush.bf16.msra.mxu0 %v1120
      %1144 = vmatpush.bf16.msra.mxu0 %v1119
      %1145 = vmatpush.bf16.msra.mxu0 %v1118
      %1146 = vmatpush.bf16.msra.mxu0 %v1117
      %1147 = vmatpush.bf16.msra.mxu0 %v1116
      %1148 = vmatpush.bf16.msra.mxu0 %v1115
      %1149 = vmatpush.bf16.msra.mxu0 %v1114
      %1150 = vmatpush.bf16.msra.mxu0 %v1113
      %1151 = vmatmul.bf16.gmra.mxu0 %v1048
      %v1152 = vpop.f32.mrf.mxu0
      %v1153 = vadd.f32 0.0, %v1152
      %v1154 = vpop.f32.mrf.mxu0
      %v1155 = vadd.f32 0.0, %v1154
      %1156 = vmatmul.bf16.gmra.mxu0 %v1051
      %v1157 = vpop.f32.mrf.mxu0
      %v1158 = vadd.f32 0.0, %v1157
      %v1159 = vpop.f32.mrf.mxu0
      %v1160 = vadd.f32 0.0, %v1159
      %1161 = vmatmul.bf16.gmra.mxu0 %v1054
      %v1162 = vpop.f32.mrf.mxu0
      %v1163 = vadd.f32 0.0, %v1162
      %v1164 = vpop.f32.mrf.mxu0
      %v1165 = vadd.f32 0.0, %v1164
      %1166 = vmatmul.bf16.gmra.mxu0 %v1057
      %v1167 = vpop.f32.mrf.mxu0
      %v1168 = vadd.f32 0.0, %v1167
      %v1169 = vpop.f32.mrf.mxu0
      %v1170 = vadd.f32 0.0, %v1169
      %1171 = vdwg.mxu0
      %1172 = vmatpush.bf16.msra.mxu0 0
      %1173 = vmatpush.bf16.msra.mxu0 0
      %1174 = vmatpush.bf16.msra.mxu0 0
      %1175 = vmatpush.bf16.msra.mxu0 0
      %1176 = vmatpush.bf16.msra.mxu0 0
      %1177 = vmatpush.bf16.msra.mxu0 0
      %1178 = vmatpush.bf16.msra.mxu0 0
      %1179 = vmatpush.bf16.msra.mxu0 %v1121
      %1180 = vmatmul.bf16.gmra.mxu0 %v1132
      %v1181 = vpop.f32.mrf.mxu0
      %v1182 = vadd.f32 %v1153, %v1181
      %v1183 = vpop.f32.mrf.mxu0
      %v1184 = vadd.f32 %v1155, %v1183
      %1185 = vmatmul.bf16.gmra.mxu0 %v1135
      %v1186 = vpop.f32.mrf.mxu0
      %v1187 = vadd.f32 %v1158, %v1186
      %v1188 = vpop.f32.mrf.mxu0
      %v1189 = vadd.f32 %v1160, %v1188
      %1190 = vmatmul.bf16.gmra.mxu0 %v1138
      %v1191 = vpop.f32.mrf.mxu0
      %v1192 = vadd.f32 %v1163, %v1191
      %v1193 = vpop.f32.mrf.mxu0
      %v1194 = vadd.f32 %v1165, %v1193
      %1195 = vmatmul.bf16.gmra.mxu0 %v1141
      %v1196 = vpop.f32.mrf.mxu0
      %v1197 = vadd.f32 %v1168, %v1196
      %v1198 = vpop.f32.mrf.mxu0
      %v1199 = vadd.f32 %v1170, %v1198
      %1200 = vdwg.mxu0
      %v1201 = vpack.c.bf16 %v1182, %v1182
      %v1202 = vpack.c.bf16 %v1184, %v1184
      %v1203 = vpack.c.bf16 %v1187, %v1187
      %v1204 = vpack.c.bf16 %v1189, %v1189
      %v1205 = vpack.c.bf16 %v1192, %v1192
      %v1206 = vpack.c.bf16 %v1194, %v1194
      %v1207 = vpack.c.bf16 %v1197, %v1197
      %v1208 = vpack.c.bf16 %v1199, %v1199
      %vm1209 = vcmask 257024
      %1210 = vst.msk [vmem:[%s352] sm:$0xf] %vm1209, %v1201
      %1211 = vst.msk [vmem:[%s352 + $0x4] sm:$0xf] %vm1209, %v1202
      %1212 = vst.msk [vmem:[%s352 + $0x8] sm:$0xf] %vm1209, %v1203
      %1213 = vst.msk [vmem:[%s352 + $0xc] sm:$0xf] %vm1209, %v1204
      %1214 = vst.msk [vmem:[%s352 + $0x10] sm:$0xf] %vm1209, %v1205
      %1215 = vst.msk [vmem:[%s352 + $0x14] sm:$0xf] %vm1209, %v1206
      %1216 = vst.msk [vmem:[%s352 + $0x18] sm:$0xf] %vm1209, %v1207
      %1217 = vst.msk [vmem:[%s352 + $0x1c] sm:$0xf] %vm1209, %v1208
      %1226 = vrot.lane.b32.xlu0 %v1201, 96
      %v1227 = vpop.permute.xlu0 %1226
      %1228 = vrot.lane.b32.xlu0 %v1202, 96
      %v1229 = vpop.permute.xlu0 %1228
      %1230 = vrot.lane.b32.xlu0 %v1203, 96
      %v1231 = vpop.permute.xlu0 %1230
      %1232 = vrot.lane.b32.xlu0 %v1204, 96
      %v1233 = vpop.permute.xlu0 %1232
      %1234 = vrot.lane.b32.xlu0 %v1205, 96
      %v1235 = vpop.permute.xlu0 %1234
      %1236 = vrot.lane.b32.xlu0 %v1206, 96
      %v1237 = vpop.permute.xlu0 %1236
      %1238 = vrot.lane.b32.xlu0 %v1207, 96
      %v1239 = vpop.permute.xlu0 %1238
      %1240 = vrot.lane.b32.xlu0 %v1208, 96
      %v1241 = vpop.permute.xlu0 %1240
      %1250 = vst.msk [vmem:[%s357] sm:$0xf] %vm1209, %v1227
      %1251 = vst.msk [vmem:[%s357 + $0x4] sm:$0xf] %vm1209, %v1229
      %1252 = vst.msk [vmem:[%s357 + $0x8] sm:$0xf] %vm1209, %v1231
      %1253 = vst.msk [vmem:[%s357 + $0xc] sm:$0xf] %vm1209, %v1233
      %1254 = vst.msk [vmem:[%s357 + $0x10] sm:$0xf] %vm1209, %v1235
      %1255 = vst.msk [vmem:[%s357 + $0x14] sm:$0xf] %vm1209, %v1237
      %1256 = vst.msk [vmem:[%s357 + $0x18] sm:$0xf] %vm1209, %v1239
      %1257 = vst.msk [vmem:[%s357 + $0x1c] sm:$0xf] %vm1209, %v1241
      %v1258 = vsel %vm1019, %v1182, 0.0
      %v1259 = vsel %vm1019, %v1184, 0.0
      %v1260 = vadd.f32 %v1258, %v1259
      %v1261 = vsel %vm1019, %v1187, 0.0
      %v1262 = vadd.f32 %v1260, %v1261
      %v1263 = vsel %vm1019, %v1189, 0.0
      %v1264 = vadd.f32 %v1262, %v1263
      %v1265 = vsel %vm1019, %v1192, 0.0
      %v1266 = vadd.f32 %v1264, %v1265
      %v1267 = vsel %vm1019, %v1194, 0.0
      %v1268 = vadd.f32 %v1266, %v1267
      %v1269 = vsel %vm1019, %v1197, 0.0
      %v1270 = vadd.f32 %v1268, %v1269
      %v1271 = vsel %vm1019, %v1199, 0.0
      %v1272 = vadd.f32 %v1270, %v1271
      %v1273 = vrot.slane %v1272, 4
      %v1274 = vadd.f32 %v1272, %v1273
      %v1275 = vrot.slane %v1274, 2
      %v1276 = vadd.f32 %v1274, %v1275
      %v1277 = vrot.slane %v1276, 1
      %v1278 = vadd.f32 %v1276, %v1277
      %v1279 = vmul.f32 %v1182, %v1182
      %v1280 = vmul.f32 %v1184, %v1184
      %v1281 = vmul.f32 %v1187, %v1187
      %v1282 = vmul.f32 %v1189, %v1189
      %v1283 = vmul.f32 %v1192, %v1192
      %v1284 = vmul.f32 %v1194, %v1194
      %v1285 = vmul.f32 %v1197, %v1197
      %v1286 = vmul.f32 %v1199, %v1199
      %v1287 = vsel %vm1019, %v1279, 0.0
      %v1288 = vsel %vm1019, %v1280, 0.0
      %v1289 = vadd.f32 %v1287, %v1288
      %v1290 = vsel %vm1019, %v1281, 0.0
      %v1291 = vadd.f32 %v1289, %v1290
      %v1292 = vsel %vm1019, %v1282, 0.0
      %v1293 = vadd.f32 %v1291, %v1292
      %v1294 = vsel %vm1019, %v1283, 0.0
      %v1295 = vadd.f32 %v1293, %v1294
      %v1296 = vsel %vm1019, %v1284, 0.0
      %v1297 = vadd.f32 %v1295, %v1296
      %v1298 = vsel %vm1019, %v1285, 0.0
      %v1299 = vadd.f32 %v1297, %v1298
      %v1300 = vsel %vm1019, %v1286, 0.0
      %v1301 = vadd.f32 %v1299, %v1300
      %v1302 = vrot.slane %v1301, 4
      %v1303 = vadd.f32 %v1301, %v1302
      %v1304 = vrot.slane %v1303, 2
      %v1305 = vadd.f32 %v1303, %v1304
      %v1306 = vrot.slane %v1305, 1
      %v1307 = vadd.f32 %v1305, %v1306
      %vm1308 = vcmask 1040384
      %v1309 = vsel %vm1308, %v1278, %v1307
      %vm1310 = vcmask 517120
      %1311 = vst.msk [vmem:[%s361] sm:$0x3] %vm1310, %v1309
      %p1312 = scmp.lt.s32.totalorder %s19, 1
      %s1313 = scalar_select %p1312, %s19, 1
      %s1314 = smul.addr %s1313, 8
      %s1315 = smul.addr %s1314, 4
      %s1316 = scalar_lea.vmem %s5, %s1315
      %p1317 = scmp.lt.s32.totalorder %s19, 1
      %s1318 = scalar_select %p1317, %s19, 1
      %s1319 = smul.addr %s1318, 8
      %s1320 = smul.addr %s1319, 4
      %s1321 = scalar_lea.vmem %s6, %s1320
      %p1322 = scmp.lt.s32.totalorder %s19, 1
      %s1323 = scalar_select %p1322, %s19, 1
      %s1324 = smul.addr %s1323, 2
      %s1325 = scalar_lea.vmem %s7, %s1324
      // Predicated region
      $region41: #{_lambda_.3} parent=39 // pred_check
        %p1326 = pneg %p162
      $region42: #{_lambda_.3} parent=39 // pred_check_branch
        %1328 = sbr.rel (%p1326) target = $region44
      $region43: #{_lambda_.3} parent=39 // pred_region
        _
      $region44: #{_lambda_.3} parent=39 // pred_fallthru
        _
      // Predicated region
      $region45: #{_lambda_.3} parent=39 // pred_check
        %p1329 = pneg %p188
      $region46: #{_lambda_.3} parent=39 // pred_check_branch
        %1331 = sbr.rel (%p1329) target = $region48
      $region47: #{_lambda_.3} parent=39 // pred_region
        _
      $region48: #{_lambda_.3} parent=39 // pred_fallthru
        _
      // Predicated region
      $region49: #{_lambda_.3} parent=39 // pred_check
        %p1332 = pneg %p214
      $region50: #{_lambda_.3} parent=39 // pred_check_branch
        %1334 = sbr.rel (%p1332) target = $region52
      $region51: #{_lambda_.3} parent=39 // pred_region
        _
      $region52: #{_lambda_.3} parent=39 // pred_fallthru
        _
    $region40: #{_lambda_.3} parent=5 // pred_fallthru
      _
    %p1335 = scmp.le.s32.totalorder 2, %s14
    // Predicated region
    $region53: #{_lambda_.3} parent=5 // pred_check
      %p1336 = pneg %p1335
    $region54: #{_lambda_.3} parent=5 // pred_check_branch
      %1338 = sbr.rel (%p1336) target = $region56
    $region55: #{_lambda_.3} parent=5 // pred_region
      %s1339 = ssub.s32 %s14, 2
      // Predicated region
      $region57: #{_lambda_.3} parent=55 // pred_check
        %p1340 = pneg %p168
      $region58: #{_lambda_.3} parent=55 // pred_check_branch
        %1342 = sbr.rel (%p1340) target = $region60
      $region59: #{_lambda_.3} parent=55 // pred_region
        %p1343 = scmp.lt.s32.totalorder %s20, 1
        %s1344 = scalar_select %p1343, %s20, 1
        %s1345 = smul.addr %s1344, 8
        %s1346 = smul.addr %s1345, 4
        %s1347 = scalar_lea.vmem %s5, %s1346
      $region60: #{_lambda_.3} parent=55 // pred_fallthru
        _
      // Predicated region
      $region61: #{_lambda_.3} parent=55 // pred_check
        %p1348 = pneg %p194
      $region62: #{_lambda_.3} parent=55 // pred_check_branch
        %1350 = sbr.rel (%p1348) target = $region64
      $region63: #{_lambda_.3} parent=55 // pred_region
        %p1351 = scmp.lt.s32.totalorder %s20, 1
        %s1352 = scalar_select %p1351, %s20, 1
        %s1353 = smul.addr %s1352, 8
        %s1354 = smul.addr %s1353, 4
        %s1355 = scalar_lea.vmem %s6, %s1354
      $region64: #{_lambda_.3} parent=55 // pred_fallthru
        _
      // Predicated region
      $region65: #{_lambda_.3} parent=55 // pred_check
        %p1356 = pneg %p220
      $region66: #{_lambda_.3} parent=55 // pred_check_branch
        %1358 = sbr.rel (%p1356) target = $region68
      $region67: #{_lambda_.3} parent=55 // pred_region
        %p1359 = scmp.lt.s32.totalorder %s20, 1
        %s1360 = scalar_select %p1359, %s20, 1
        %s1361 = smul.addr %s1360, 2
        %s1362 = scalar_lea.vmem %s7, %s1361
      $region68: #{_lambda_.3} parent=55 // pred_fallthru
        _
    $region56: #{_lambda_.3} parent=5 // pred_fallthru
      _
  $region6: #{_lambda_.3} parent=0 // loop_footer
    %s18 = sadd.s32 1, %s14
  $region7: #{_lambda_.3} parent=0 // loop_footer_branch
    %13 = sbr.rel target = $region3
  $region8: #{_lambda_.3} parent=0 // loop_exit
    _

</llo_original>
